<compile_context>
chip_gen: v6e
topology: v6e:2x2x1
jax: 0.10.0
libtpu: 0.0.40
codegen_flags: <defaults>
</compile_context>

<pallas_src>
import functools

import numpy as np
import jax
import jax.numpy as jnp
from jax import lax
from jax.experimental import pallas as pl
from jax.experimental.pallas import tpu as pltpu


def _mixed_op_kernel(arch_ref,   # SMEM (5,) f32 architecture weights (only [1] used)
                     x_ref,      # VMEM (1, th+2, W+2, C) bf16 haloed row-band of x
                     w_ref,      # VMEM (9, C, C) bf16 folded tap weights
                     b_ref,      # VMEM (1, C) f32 fused bias (arch2*bn1b + arch3*bn3b)
                     inv_ref,    # VMEM (1, th*W, 1) f32 = arch4 / pool-count
                     o_ref,      # VMEM (1, th*W, C) f32
                     *, th, W):
    TR, C = o_ref.shape[1], o_ref.shape[2]
    skip_w = arch_ref[1]                       # 'skip_connect' weight
    inv = inv_ref[0]                           # (TR, 1)

    # single f32 accumulator, initialized with the fused conv-branch bias
    acc = jnp.zeros((TR, C), jnp.float32) + b_ref[...]

    for dh in range(3):
        # aligned load of rows dh .. dh+th-1 of the haloed band, cast once to f32
        slab = x_ref[0, dh:dh + th, :, :].astype(jnp.float32)   # (th, W+2, C)
        for dw in range(3):
            t = dh * 3 + dw
            tap = slab[:, dw:dw + W, :].reshape(TR, C)          # (TR, C) f32
            # avg_pool_3x3 contribution (arch4 already folded into inv)
            acc = acc + tap * inv
            if t == 4:                                          # center tap == x
                acc = acc + skip_w * tap                        # skip_connect
            # conv taps: 1x1 + BN + arch weights folded into w_ref
            acc = acc + jnp.dot(jnp.maximum(tap, 0.0).astype(jnp.bfloat16),
                                w_ref[t],
                                preferred_element_type=jnp.float32)

    o_ref[0] = acc


def _choose_band(H, W, N, target_rows=512, min_grid=4):
    """Rows-per-band: divisor of H, ~target_rows output rows, >=min_grid steps."""
    divisors = [d for d in range(1, H + 1) if H % d == 0]
    good = [d for d in divisors if d * W <= target_rows and N * (H // d) >= min_grid]
    if good:
        return max(good)
    ok = [d for d in divisors if d * W <= target_rows]
    return max(ok) if ok else 1


@functools.partial(jax.jit, static_argnames=("target_rows",))
def mixed_op(x_nchw, arch_w, params, *, target_rows=512):
    """MixedOp forward. x_nchw: (N, C, H, W) f32, arch_w: (5,) f32."""
    N, C, H, W = x_nchw.shape
    assert W % 8 == 0, "W must be a multiple of 8 (sublane-clean in-kernel reshape)"

    th = _choose_band(H, W, N, target_rows=target_rows)
    nb = H // th
    G = N * nb

    w1, w3, bn1s, bn1b, bn3s, bn3b = params
    arch_w = arch_w.astype(jnp.float32)

    # Fold arch weights + BN scales of both conv branches into one tap-weight
    # tensor (center tap also absorbs the 1x1 branch) + one fused bias.
    w_eff = arch_w[3] * w3.astype(jnp.float32) * bn3s.reshape(1, 1, C)
    w_eff = w_eff.at[4].add(arch_w[2] * w1.astype(jnp.float32) * bn1s.reshape(1, C))
    w_eff = w_eff.astype(jnp.bfloat16)
    b_eff = (arch_w[2] * bn1b + arch_w[3] * bn3b).reshape(1, C).astype(jnp.float32)

    # One zero-padded NHWC copy of x, cut into (th+2)-row halo bands (bf16).
    x_nhwc = jnp.transpose(x_nchw, (0, 2, 3, 1))
    xp = jnp.pad(x_nhwc, ((0, 0), (1, 1), (1, 1), (0, 0))).astype(jnp.bfloat16)
    bands = jnp.stack([xp[:, i * th:i * th + th + 2] for i in range(nb)], axis=1)
    bands = bands.reshape(G, th + 2, W + 2, C)

    # avg_pool_3x3 divisor (count_include_pad=False): exact arch4/count column.
    h = jnp.arange(H)
    w = jnp.arange(W)
    rcnt = 3 - (h == 0).astype(jnp.int32) - (h == H - 1).astype(jnp.int32)
    ccnt = 3 - (w == 0).astype(jnp.int32) - (w == W - 1).astype(jnp.int32)
    inv = arch_w[4] / (rcnt[:, None] * ccnt[None, :]).astype(jnp.float32)   # (H, W)
    inv = inv.reshape(nb, th * W, 1)
    inv = jnp.tile(inv[None], (N, 1, 1, 1)).reshape(G, th * W, 1)

    kernel = functools.partial(_mixed_op_kernel, th=th, W=W)

    out = pl.pallas_call(
        kernel,
        out_shape=jax.ShapeDtypeStruct((G, th * W, C), jnp.float32),
        grid_spec=pl.GridSpec(
            grid=(G,),
            in_specs=[
                pl.BlockSpec(memory_space=pltpu.MemorySpace.SMEM),           # arch weights
                pl.BlockSpec((1, th + 2, W + 2, C), lambda g: (g, 0, 0, 0)),  # haloed band
                pl.BlockSpec((9, C, C), lambda g: (0, 0, 0)),                 # folded taps
                pl.BlockSpec((1, C), lambda g: (0, 0)),                       # fused bias
                pl.BlockSpec((1, th * W, 1), lambda g: (g, 0, 0)),            # arch4/count
            ],
            out_specs=pl.BlockSpec((1, th * W, C), lambda g: (g, 0, 0)),
        ),
        compiler_params=pltpu.CompilerParams(
            dimension_semantics=("parallel",)),
    )(arch_w, bands, w_eff, b_eff, inv)

    out = out.reshape(N, nb, th, W, C)
    return jnp.transpose(out, (0, 4, 1, 2, 3)).reshape(N, C, H, W)


def mixed_op_reference(x, arch_w, params):
    """Pure-JAX reference (NCHW, f32), used only to validate the kernel."""
    w1, w3, bn1s, bn1b, bn3s, bn3b = params
    N, C, H, W = x.shape
    relu = jnp.maximum(x, 0.0)

    wt1 = jnp.transpose(w1)[:, :, None, None]                 # (C_out, C_in, 1, 1)
    c1 = lax.conv_general_dilated(relu, wt1, (1, 1), 'VALID',
                                  dimension_numbers=('NCHW', 'OIHW', 'NCHW'))
    c1 = c1 * bn1s.reshape(1, C, 1, 1) + bn1b.reshape(1, C, 1, 1)

    wt3 = jnp.transpose(w3.reshape(3, 3, C, C), (3, 2, 0, 1))  # (C_out, C_in, 3, 3)
    c3 = lax.conv_general_dilated(relu, wt3, (1, 1), ((1, 1), (1, 1)),
                                  dimension_numbers=('NCHW', 'OIHW', 'NCHW'))
    c3 = c3 * bn3s.reshape(1, C, 1, 1) + bn3b.reshape(1, C, 1, 1)

    psum = lax.reduce_window(x, jnp.float32(0), lax.add, (1, 1, 3, 3),
                             (1, 1, 1, 1), ((0, 0), (0, 0), (1, 1), (1, 1)))
    ones = jnp.ones((1, 1, H, W), x.dtype)
    cnt = lax.reduce_window(ones, jnp.float32(0), lax.add, (1, 1, 3, 3),
                            (1, 1, 1, 1), ((0, 0), (0, 0), (1, 1), (1, 1)))
    pool = psum / cnt

    return (arch_w[1] * x + arch_w[2] * c1 + arch_w[3] * c3 + arch_w[4] * pool)


def make_params(C, key):
    """Deterministic synthetic parameters (shapes from MixedOp.__init__)."""
    k1, k2 = jax.random.split(key)
    # conv weights stored in kernel layout: (C_in, C_out) per tap.
    w1 = jax.random.normal(k1, (C, C), jnp.float32) / np.sqrt(C)
    w3 = jax.random.normal(k2, (9, C, C), jnp.float32) / np.sqrt(9 * C)
    # BatchNorm2d defaults: gamma=1, beta=0, running_mean=0, running_var=1.
    eps = 1e-5
    gamma = jnp.ones((C,), jnp.float32)
    beta = jnp.zeros((C,), jnp.float32)
    rmean = jnp.zeros((C,), jnp.float32)
    rvar = jnp.ones((C,), jnp.float32)
    scale = (gamma / jnp.sqrt(rvar + eps)).reshape(1, C)
    shift = (beta - rmean * scale.reshape(C)).reshape(1, C)
    return (w1, w3, scale, shift, scale, shift)


if __name__ == "__main__":
    key = jax.random.PRNGKey(0)
    kx, kw, kp = jax.random.split(key, 3)

    N, C, H, W = 2, 4, 16, 16
    x = jax.random.normal(kx, (N, C, H, W), jnp.float32)
    arch_w = jax.nn.softmax(jax.random.normal(kw, (5,), jnp.float32))
    params = make_params(C, kp)

    out = jax.block_until_ready(mixed_op(x, arch_w, params))
    ref = jax.block_until_ready(mixed_op_reference(x, arch_w, params))

    # bf16 activation/weight storage -> slightly looser tolerance than pure f32.
    np.testing.assert_allclose(np.asarray(out), np.asarray(ref),
                               rtol=2e-2, atol=2e-2)
    assert out.shape == (N, C, H, W)
    print("KERNEL_OK")
</pallas_src>

<mosaic_0001>
module attributes {stable_mosaic.version = 11 : i64} {
  func.func @_mixed_op_kernel(%arg0: i32, %arg1: memref<5xf32, #tpu.memory_space<smem>>, %arg2: memref<1x10x18x4xbf16, #tpu.memory_space<vmem>>, %arg3: memref<9x4x4xbf16, #tpu.memory_space<vmem>>, %arg4: memref<1x4xf32, #tpu.memory_space<vmem>>, %arg5: memref<1x128x1xf32, #tpu.memory_space<vmem>>, %arg6: memref<1x128x4xf32, #tpu.memory_space<vmem>>) attributes {dimension_semantics = [#tpu.dimension_semantics<parallel>], iteration_bounds = array<i64: 4>, scalar_prefetch = 0 : i64, scratch_operands = 0 : i64, tpu.core_type = #tpu.core_type<tc>, window_params = [{transform_indices = @transform_0, window_bounds = array<i64: 5>}, {transform_indices = @transform_1, window_bounds = array<i64: 1, 10, 18, 4>}, {pipeline_mode = #tpu.pipeline_mode<synchronous>, transform_indices = @transform_2, window_bounds = array<i64: 9, 4, 4>}, {pipeline_mode = #tpu.pipeline_mode<synchronous>, transform_indices = @transform_3, window_bounds = array<i64: 1, 4>}, {transform_indices = @transform_4, window_bounds = array<i64: 1, 128, 1>}, {transform_indices = @transform_5, window_bounds = array<i64: 1, 128, 4>}]} {
    %c1 = arith.constant 1 : index
    %0 = memref.load %arg1[%c1] : memref<5xf32, #tpu.memory_space<smem>>
    %c0 = arith.constant 0 : index
    %c0_0 = arith.constant 0 : index
    %c0_1 = arith.constant 0 : index
    %1 = vector.load %arg5[%c0, %c0_0, %c0_1] : memref<1x128x1xf32, #tpu.memory_space<vmem>>, vector<1x128x1xf32>
    %2 = vector.shape_cast %1 : vector<1x128x1xf32> to vector<128x1xf32>
    %cst = arith.constant 0.000000e+00 : f32
    %3 = vector.broadcast %cst : f32 to vector<128x4xf32>
    %c0_2 = arith.constant 0 : index
    %c0_3 = arith.constant 0 : index
    %4 = vector.load %arg4[%c0_2, %c0_3] : memref<1x4xf32, #tpu.memory_space<vmem>>, vector<1x4xf32>
    %5 = vector.broadcast %4 : vector<1x4xf32> to vector<128x4xf32>
    %6 = arith.addf %3, %5 : vector<128x4xf32>
    %c0_4 = arith.constant 0 : index
    %c0_5 = arith.constant 0 : index
    %c0_6 = arith.constant 0 : index
    %c0_7 = arith.constant 0 : index
    %7 = vector.load %arg2[%c0_4, %c0_5, %c0_6, %c0_7] : memref<1x10x18x4xbf16, #tpu.memory_space<vmem>>, vector<1x8x18x4xbf16>
    %8 = vector.shape_cast %7 : vector<1x8x18x4xbf16> to vector<8x18x4xbf16>
    %9 = arith.extf %8 : vector<8x18x4xbf16> to vector<8x18x4xf32>
    %10 = vector.extract_strided_slice %9 {offsets = [0, 0, 0], sizes = [8, 16, 4], strides = [1, 1, 1]} : vector<8x18x4xf32> to vector<8x16x4xf32>
    %11 = vector.shape_cast %10 : vector<8x16x4xf32> to vector<128x4xf32>
    %12 = vector.broadcast %2 : vector<128x1xf32> to vector<128x4xf32>
    %13 = arith.mulf %11, %12 : vector<128x4xf32>
    %14 = arith.addf %6, %13 : vector<128x4xf32>
    %cst_8 = arith.constant 0.000000e+00 : f32
    %15 = vector.broadcast %cst_8 : f32 to vector<128x4xf32>
    %16 = arith.maximumf %11, %15 : vector<128x4xf32>
    %17 = arith.truncf %16 : vector<128x4xf32> to vector<128x4xbf16>
    %c0_9 = arith.constant 0 : index
    %c0_10 = arith.constant 0 : index
    %c0_11 = arith.constant 0 : index
    %18 = vector.load %arg3[%c0_9, %c0_10, %c0_11] : memref<9x4x4xbf16, #tpu.memory_space<vmem>>, vector<1x4x4xbf16>
    %19 = vector.shape_cast %18 : vector<1x4x4xbf16> to vector<4x4xbf16>
    %cst_12 = arith.constant dense<0.000000e+00> : vector<128x4xf32>
    %20 = tpu.matmul %17, %19, %cst_12 {dimension_numbers = #tpu.dot_dimension_numbers<[1], [0], [0], [1], [0, 0, 1, 1], [], []>} : vector<128x4xbf16>, vector<4x4xbf16>, vector<128x4xf32> -> vector<128x4xf32>
    %21 = arith.addf %14, %20 : vector<128x4xf32>
    %22 = vector.extract_strided_slice %9 {offsets = [0, 1, 0], sizes = [8, 16, 4], strides = [1, 1, 1]} : vector<8x18x4xf32> to vector<8x16x4xf32>
    %23 = vector.shape_cast %22 : vector<8x16x4xf32> to vector<128x4xf32>
    %24 = vector.broadcast %2 : vector<128x1xf32> to vector<128x4xf32>
    %25 = arith.mulf %23, %24 : vector<128x4xf32>
    %26 = arith.addf %21, %25 : vector<128x4xf32>
    %cst_13 = arith.constant 0.000000e+00 : f32
    %27 = vector.broadcast %cst_13 : f32 to vector<128x4xf32>
    %28 = arith.maximumf %23, %27 : vector<128x4xf32>
    %29 = arith.truncf %28 : vector<128x4xf32> to vector<128x4xbf16>
    %c1_14 = arith.constant 1 : index
    %c0_15 = arith.constant 0 : index
    %c0_16 = arith.constant 0 : index
    %30 = vector.load %arg3[%c1_14, %c0_15, %c0_16] : memref<9x4x4xbf16, #tpu.memory_space<vmem>>, vector<1x4x4xbf16>
    %31 = vector.shape_cast %30 : vector<1x4x4xbf16> to vector<4x4xbf16>
    %cst_17 = arith.constant dense<0.000000e+00> : vector<128x4xf32>
    %32 = tpu.matmul %29, %31, %cst_17 {dimension_numbers = #tpu.dot_dimension_numbers<[1], [0], [0], [1], [0, 0, 1, 1], [], []>} : vector<128x4xbf16>, vector<4x4xbf16>, vector<128x4xf32> -> vector<128x4xf32>
    %33 = arith.addf %26, %32 : vector<128x4xf32>
    %34 = vector.extract_strided_slice %9 {offsets = [0, 2, 0], sizes = [8, 16, 4], strides = [1, 1, 1]} : vector<8x18x4xf32> to vector<8x16x4xf32>
    %35 = vector.shape_cast %34 : vector<8x16x4xf32> to vector<128x4xf32>
    %36 = vector.broadcast %2 : vector<128x1xf32> to vector<128x4xf32>
    %37 = arith.mulf %35, %36 : vector<128x4xf32>
    %38 = arith.addf %33, %37 : vector<128x4xf32>
    %cst_18 = arith.constant 0.000000e+00 : f32
    %39 = vector.broadcast %cst_18 : f32 to vector<128x4xf32>
    %40 = arith.maximumf %35, %39 : vector<128x4xf32>
    %41 = arith.truncf %40 : vector<128x4xf32> to vector<128x4xbf16>
    %c2 = arith.constant 2 : index
    %c0_19 = arith.constant 0 : index
    %c0_20 = arith.constant 0 : index
    %42 = vector.load %arg3[%c2, %c0_19, %c0_20] : memref<9x4x4xbf16, #tpu.memory_space<vmem>>, vector<1x4x4xbf16>
    %43 = vector.shape_cast %42 : vector<1x4x4xbf16> to vector<4x4xbf16>
    %cst_21 = arith.constant dense<0.000000e+00> : vector<128x4xf32>
    %44 = tpu.matmul %41, %43, %cst_21 {dimension_numbers = #tpu.dot_dimension_numbers<[1], [0], [0], [1], [0, 0, 1, 1], [], []>} : vector<128x4xbf16>, vector<4x4xbf16>, vector<128x4xf32> -> vector<128x4xf32>
    %45 = arith.addf %38, %44 : vector<128x4xf32>
    %c0_22 = arith.constant 0 : index
    %c1_23 = arith.constant 1 : index
    %c0_24 = arith.constant 0 : index
    %c0_25 = arith.constant 0 : index
    %46 = vector.load %arg2[%c0_22, %c1_23, %c0_24, %c0_25] : memref<1x10x18x4xbf16, #tpu.memory_space<vmem>>, vector<1x8x18x4xbf16>
    %47 = vector.shape_cast %46 : vector<1x8x18x4xbf16> to vector<8x18x4xbf16>
    %48 = arith.extf %47 : vector<8x18x4xbf16> to vector<8x18x4xf32>
    %49 = vector.extract_strided_slice %48 {offsets = [0, 0, 0], sizes = [8, 16, 4], strides = [1, 1, 1]} : vector<8x18x4xf32> to vector<8x16x4xf32>
    %50 = vector.shape_cast %49 : vector<8x16x4xf32> to vector<128x4xf32>
    %51 = vector.broadcast %2 : vector<128x1xf32> to vector<128x4xf32>
    %52 = arith.mulf %50, %51 : vector<128x4xf32>
    %53 = arith.addf %45, %52 : vector<128x4xf32>
    %cst_26 = arith.constant 0.000000e+00 : f32
    %54 = vector.broadcast %cst_26 : f32 to vector<128x4xf32>
    %55 = arith.maximumf %50, %54 : vector<128x4xf32>
    %56 = arith.truncf %55 : vector<128x4xf32> to vector<128x4xbf16>
    %c3 = arith.constant 3 : index
    %c0_27 = arith.constant 0 : index
    %c0_28 = arith.constant 0 : index
    %57 = vector.load %arg3[%c3, %c0_27, %c0_28] : memref<9x4x4xbf16, #tpu.memory_space<vmem>>, vector<1x4x4xbf16>
    %58 = vector.shape_cast %57 : vector<1x4x4xbf16> to vector<4x4xbf16>
    %cst_29 = arith.constant dense<0.000000e+00> : vector<128x4xf32>
    %59 = tpu.matmul %56, %58, %cst_29 {dimension_numbers = #tpu.dot_dimension_numbers<[1], [0], [0], [1], [0, 0, 1, 1], [], []>} : vector<128x4xbf16>, vector<4x4xbf16>, vector<128x4xf32> -> vector<128x4xf32>
    %60 = arith.addf %53, %59 : vector<128x4xf32>
    %61 = vector.extract_strided_slice %48 {offsets = [0, 1, 0], sizes = [8, 16, 4], strides = [1, 1, 1]} : vector<8x18x4xf32> to vector<8x16x4xf32>
    %62 = vector.shape_cast %61 : vector<8x16x4xf32> to vector<128x4xf32>
    %63 = vector.broadcast %2 : vector<128x1xf32> to vector<128x4xf32>
    %64 = arith.mulf %62, %63 : vector<128x4xf32>
    %65 = arith.addf %60, %64 : vector<128x4xf32>
    %66 = vector.broadcast %0 : f32 to vector<128x4xf32>
    %67 = arith.mulf %66, %62 : vector<128x4xf32>
    %68 = arith.addf %65, %67 : vector<128x4xf32>
    %cst_30 = arith.constant 0.000000e+00 : f32
    %69 = vector.broadcast %cst_30 : f32 to vector<128x4xf32>
    %70 = arith.maximumf %62, %69 : vector<128x4xf32>
    %71 = arith.truncf %70 : vector<128x4xf32> to vector<128x4xbf16>
    %c4 = arith.constant 4 : index
    %c0_31 = arith.constant 0 : index
    %c0_32 = arith.constant 0 : index
    %72 = vector.load %arg3[%c4, %c0_31, %c0_32] : memref<9x4x4xbf16, #tpu.memory_space<vmem>>, vector<1x4x4xbf16>
    %73 = vector.shape_cast %72 : vector<1x4x4xbf16> to vector<4x4xbf16>
    %cst_33 = arith.constant dense<0.000000e+00> : vector<128x4xf32>
    %74 = tpu.matmul %71, %73, %cst_33 {dimension_numbers = #tpu.dot_dimension_numbers<[1], [0], [0], [1], [0, 0, 1, 1], [], []>} : vector<128x4xbf16>, vector<4x4xbf16>, vector<128x4xf32> -> vector<128x4xf32>
    %75 = arith.addf %68, %74 : vector<128x4xf32>
    %76 = vector.extract_strided_slice %48 {offsets = [0, 2, 0], sizes = [8, 16, 4], strides = [1, 1, 1]} : vector<8x18x4xf32> to vector<8x16x4xf32>
    %77 = vector.shape_cast %76 : vector<8x16x4xf32> to vector<128x4xf32>
    %78 = vector.broadcast %2 : vector<128x1xf32> to vector<128x4xf32>
    %79 = arith.mulf %77, %78 : vector<128x4xf32>
    %80 = arith.addf %75, %79 : vector<128x4xf32>
    %cst_34 = arith.constant 0.000000e+00 : f32
    %81 = vector.broadcast %cst_34 : f32 to vector<128x4xf32>
    %82 = arith.maximumf %77, %81 : vector<128x4xf32>
    %83 = arith.truncf %82 : vector<128x4xf32> to vector<128x4xbf16>
    %c5 = arith.constant 5 : index
    %c0_35 = arith.constant 0 : index
    %c0_36 = arith.constant 0 : index
    %84 = vector.load %arg3[%c5, %c0_35, %c0_36] : memref<9x4x4xbf16, #tpu.memory_space<vmem>>, vector<1x4x4xbf16>
    %85 = vector.shape_cast %84 : vector<1x4x4xbf16> to vector<4x4xbf16>
    %cst_37 = arith.constant dense<0.000000e+00> : vector<128x4xf32>
    %86 = tpu.matmul %83, %85, %cst_37 {dimension_numbers = #tpu.dot_dimension_numbers<[1], [0], [0], [1], [0, 0, 1, 1], [], []>} : vector<128x4xbf16>, vector<4x4xbf16>, vector<128x4xf32> -> vector<128x4xf32>
    %87 = arith.addf %80, %86 : vector<128x4xf32>
    %c0_38 = arith.constant 0 : index
    %c2_39 = arith.constant 2 : index
    %c0_40 = arith.constant 0 : index
    %c0_41 = arith.constant 0 : index
    %88 = vector.load %arg2[%c0_38, %c2_39, %c0_40, %c0_41] : memref<1x10x18x4xbf16, #tpu.memory_space<vmem>>, vector<1x8x18x4xbf16>
    %89 = vector.shape_cast %88 : vector<1x8x18x4xbf16> to vector<8x18x4xbf16>
    %90 = arith.extf %89 : vector<8x18x4xbf16> to vector<8x18x4xf32>
    %91 = vector.extract_strided_slice %90 {offsets = [0, 0, 0], sizes = [8, 16, 4], strides = [1, 1, 1]} : vector<8x18x4xf32> to vector<8x16x4xf32>
    %92 = vector.shape_cast %91 : vector<8x16x4xf32> to vector<128x4xf32>
    %93 = vector.broadcast %2 : vector<128x1xf32> to vector<128x4xf32>
    %94 = arith.mulf %92, %93 : vector<128x4xf32>
    %95 = arith.addf %87, %94 : vector<128x4xf32>
    %cst_42 = arith.constant 0.000000e+00 : f32
    %96 = vector.broadcast %cst_42 : f32 to vector<128x4xf32>
    %97 = arith.maximumf %92, %96 : vector<128x4xf32>
    %98 = arith.truncf %97 : vector<128x4xf32> to vector<128x4xbf16>
    %c6 = arith.constant 6 : index
    %c0_43 = arith.constant 0 : index
    %c0_44 = arith.constant 0 : index
    %99 = vector.load %arg3[%c6, %c0_43, %c0_44] : memref<9x4x4xbf16, #tpu.memory_space<vmem>>, vector<1x4x4xbf16>
    %100 = vector.shape_cast %99 : vector<1x4x4xbf16> to vector<4x4xbf16>
    %cst_45 = arith.constant dense<0.000000e+00> : vector<128x4xf32>
    %101 = tpu.matmul %98, %100, %cst_45 {dimension_numbers = #tpu.dot_dimension_numbers<[1], [0], [0], [1], [0, 0, 1, 1], [], []>} : vector<128x4xbf16>, vector<4x4xbf16>, vector<128x4xf32> -> vector<128x4xf32>
    %102 = arith.addf %95, %101 : vector<128x4xf32>
    %103 = vector.extract_strided_slice %90 {offsets = [0, 1, 0], sizes = [8, 16, 4], strides = [1, 1, 1]} : vector<8x18x4xf32> to vector<8x16x4xf32>
    %104 = vector.shape_cast %103 : vector<8x16x4xf32> to vector<128x4xf32>
    %105 = vector.broadcast %2 : vector<128x1xf32> to vector<128x4xf32>
    %106 = arith.mulf %104, %105 : vector<128x4xf32>
    %107 = arith.addf %102, %106 : vector<128x4xf32>
    %cst_46 = arith.constant 0.000000e+00 : f32
    %108 = vector.broadcast %cst_46 : f32 to vector<128x4xf32>
    %109 = arith.maximumf %104, %108 : vector<128x4xf32>
    %110 = arith.truncf %109 : vector<128x4xf32> to vector<128x4xbf16>
    %c7 = arith.constant 7 : index
    %c0_47 = arith.constant 0 : index
    %c0_48 = arith.constant 0 : index
    %111 = vector.load %arg3[%c7, %c0_47, %c0_48] : memref<9x4x4xbf16, #tpu.memory_space<vmem>>, vector<1x4x4xbf16>
    %112 = vector.shape_cast %111 : vector<1x4x4xbf16> to vector<4x4xbf16>
    %cst_49 = arith.constant dense<0.000000e+00> : vector<128x4xf32>
    %113 = tpu.matmul %110, %112, %cst_49 {dimension_numbers = #tpu.dot_dimension_numbers<[1], [0], [0], [1], [0, 0, 1, 1], [], []>} : vector<128x4xbf16>, vector<4x4xbf16>, vector<128x4xf32> -> vector<128x4xf32>
    %114 = arith.addf %107, %113 : vector<128x4xf32>
    %115 = vector.extract_strided_slice %90 {offsets = [0, 2, 0], sizes = [8, 16, 4], strides = [1, 1, 1]} : vector<8x18x4xf32> to vector<8x16x4xf32>
    %116 = vector.shape_cast %115 : vector<8x16x4xf32> to vector<128x4xf32>
    %117 = vector.broadcast %2 : vector<128x1xf32> to vector<128x4xf32>
    %118 = arith.mulf %116, %117 : vector<128x4xf32>
    %119 = arith.addf %114, %118 : vector<128x4xf32>
    %cst_50 = arith.constant 0.000000e+00 : f32
    %120 = vector.broadcast %cst_50 : f32 to vector<128x4xf32>
    %121 = arith.maximumf %116, %120 : vector<128x4xf32>
    %122 = arith.truncf %121 : vector<128x4xf32> to vector<128x4xbf16>
    %c8 = arith.constant 8 : index
    %c0_51 = arith.constant 0 : index
    %c0_52 = arith.constant 0 : index
    %123 = vector.load %arg3[%c8, %c0_51, %c0_52] : memref<9x4x4xbf16, #tpu.memory_space<vmem>>, vector<1x4x4xbf16>
    %124 = vector.shape_cast %123 : vector<1x4x4xbf16> to vector<4x4xbf16>
    %cst_53 = arith.constant dense<0.000000e+00> : vector<128x4xf32>
    %125 = tpu.matmul %122, %124, %cst_53 {dimension_numbers = #tpu.dot_dimension_numbers<[1], [0], [0], [1], [0, 0, 1, 1], [], []>} : vector<128x4xbf16>, vector<4x4xbf16>, vector<128x4xf32> -> vector<128x4xf32>
    %126 = arith.addf %119, %125 : vector<128x4xf32>
    %c0_54 = arith.constant 0 : index
    %c0_55 = arith.constant 0 : index
    %c0_56 = arith.constant 0 : index
    %127 = vector.load %arg6[%c0_54, %c0_55, %c0_56] : memref<1x128x4xf32, #tpu.memory_space<vmem>>, vector<1x128x4xf32>
    %128 = vector.shape_cast %127 : vector<1x128x4xf32> to vector<128x4xf32>
    %129 = vector.shape_cast %126 : vector<128x4xf32> to vector<1x128x4xf32>
    tpu.vector_store %arg6[%c0_54, %c0_55, %c0_56], %129 {strides = array<i32>} : memref<1x128x4xf32, #tpu.memory_space<vmem>>, vector<1x128x4xf32>,
    return
  }
  func.func @transform_0(%arg0: i32) -> i32 {
    %c0_i32 = arith.constant 0 : i32
    %c0_i32_0 = arith.constant 0 : i32
    return %c0_i32 : i32
  }
  func.func @transform_1(%arg0: i32) -> (i32, i32, i32, i32) {
    %c0_i32 = arith.constant 0 : i32
    %c0_i32_0 = arith.constant 0 : i32
    %c0_i32_1 = arith.constant 0 : i32
    %c0_i32_2 = arith.constant 0 : i32
    return %arg0, %c0_i32, %c0_i32_0, %c0_i32_1 : i32, i32, i32, i32
  }
  func.func @transform_2(%arg0: i32) -> (i32, i32, i32) {
    %c0_i32 = arith.constant 0 : i32
    %c0_i32_0 = arith.constant 0 : i32
    %c0_i32_1 = arith.constant 0 : i32
    %c0_i32_2 = arith.constant 0 : i32
    return %c0_i32, %c0_i32_0, %c0_i32_1 : i32, i32, i32
  }
  func.func @transform_3(%arg0: i32) -> (i32, i32) {
    %c0_i32 = arith.constant 0 : i32
    %c0_i32_0 = arith.constant 0 : i32
    %c0_i32_1 = arith.constant 0 : i32
    return %c0_i32, %c0_i32_0 : i32, i32
  }
  func.func @transform_4(%arg0: i32) -> (i32, i32, i32) {
    %c0_i32 = arith.constant 0 : i32
    %c0_i32_0 = arith.constant 0 : i32
    %c0_i32_1 = arith.constant 0 : i32
    return %arg0, %c0_i32, %c0_i32_0 : i32, i32, i32
  }
  func.func @transform_5(%arg0: i32) -> (i32, i32, i32) {
    %c0_i32 = arith.constant 0 : i32
    %c0_i32_0 = arith.constant 0 : i32
    %c0_i32_1 = arith.constant 0 : i32
    return %arg0, %c0_i32, %c0_i32_0 : i32, i32, i32
  }
}

</mosaic_0001>

<llo_original>
// kernel: mixed_op.1
$region0: #{mixed_op.1}
  #allocation0 [shape = 'u32[]', space=smem, size = 0x4, offset = 0x4, fixed_abs, tag = 'smem constant byte address 0x4 - core index']
  #allocation1 [shape = 'u32[144,128]{1,0:T(1,128)}', space=vmem, size = 0x12000, scoped, tag = 'internal scratch']
  %s0 = inlined_call_operand.vmem [shape: f32[5], index: 0, kind: input, shape index: {}]
  %s1 = inlined_call_operand.vmem [shape: bf16[4,10,18,4], index: 1, kind: input, shape index: {}]
  %s2 = inlined_call_operand.vmem [shape: bf16[9,4,4], index: 2, kind: input, shape index: {}]
  %s3 = inlined_call_operand.vmem [shape: f32[1,4], index: 3, kind: input, shape index: {}]
  %s4 = inlined_call_operand.vmem [shape: f32[4,128,1], index: 4, kind: input, shape index: {}]
  %s5 = inlined_call_operand.vmem [shape: f32[4,128,4], index: 5, kind: output, shape index: {}]
  %s6 = sld [smem:[#allocation0]]
  $region57: #{mixed_op.1} parent=0
    _
  %s8 = ssub.s32 1, %s6
  %s9 = scalar_select 0, %s8, %s6
  $region1: #{mixed_op.1} parent=0
    #allocation2 [shape = 'u8[512]{0}', space=smem, size = 0x200, scoped, tag = 'input window, operand 0, single buffered']
    #allocation3 [shape = 's32[2]{0}', space=sflag, size = 0x8, scoped, tag = 'scoped memory for mixed_op.1']
    %10 = vsyncpa [#allocation3], 0
    loop: start=0, step=1, limit=6
    $region2: #{mixed_op.1} parent=1 // loop_pre_header
      _
    $region3: #{mixed_op.1} parent=1 // loop_header
      %s12 = sphi 0, %s16
      %p13 = scmp.ge.s32.totalorder %s12, 6
      %s20 = sphi 0, %s20
      %s22 = sphi 0, %s20
      %s23 = sphi 0, %s22
      %s37 = sphi 0, %s23
      %s43 = sphi 0, %s45
      %s46 = sphi 0, %s43
      %s47 = sphi 0, %s46
      %s63 = sphi 0, %s47
      %s67 = sphi 0, %s67
      %s69 = sphi 0, %s67
      %s70 = sphi 0, %s69
      %s84 = sphi 0, %s70
      %s88 = sphi 0, %s88
      %s90 = sphi 0, %s88
      %s91 = sphi 0, %s90
      %s105 = sphi 0, %s91
      %s111 = sphi 0, %s113
      %s114 = sphi 0, %s111
      %s115 = sphi 0, %s114
      %s131 = sphi 0, %s115
      %s137 = sphi 0, %s139
      %s140 = sphi 0, %s137
      %s141 = sphi 0, %s140
      %s157 = sphi 0, %s141
    $region4: #{mixed_op.1} parent=1 // loop_header_branch
      %15 = sbr.rel (%p13) target = $region8
    $region5: #{mixed_op.1} parent=1 // loop_body
      %s17 = ssub.s32 %s12, 1
      %s18 = ssub.s32 %s12, 2
      %s19 = sadd.s32 %s12, 1
      %s21 = sadd.s32 %s20, 1
      %p24 = scmp.eq.s32.totalorder %s12, 3
      %p25 = scmp.ne.s32.totalorder %s20, %s22
      %p26 = scmp.eq.s32.totalorder %s12, 0
      %p27 = por %p25, %p26
      %p28 = scmp.ne.s32.totalorder %s20, %s22
      %p29 = scmp.eq.s32.totalorder %s17, 3
      %p30 = por %p28, %p29
      %p31 = scmp.ne.s32.totalorder %s22, %s23
      %p32 = scmp.eq.s32.totalorder %s17, 0
      %p33 = por %p31, %p32
      %p34 = scmp.ne.s32.totalorder %s22, %s23
      %p35 = scmp.eq.s32.totalorder %s18, 3
      %p36 = por %p34, %p35
      %p38 = scmp.ne.s32.totalorder %s23, %s37
      %p39 = scmp.eq.s32.totalorder %s18, 0
      %p40 = por %p38, %p39
      %s41 = ssub.s32 %s12, %s19
      %p42 = scmp.eq.s32.totalorder %s41, 0
      %s44 = sadd.s32 %s43, 1
      %s45 = scalar_select %p42, %s43, %s44
      %p48 = pneg %p42
      %p49 = scmp.eq.s32.totalorder %s12, 3
      %p50 = por %p48, %p49
      %p51 = scmp.ne.s32.totalorder %s43, %s46
      %p52 = scmp.eq.s32.totalorder %s12, 0
      %p53 = por %p51, %p52
      %p54 = scmp.ne.s32.totalorder %s43, %s46
      %p55 = scmp.eq.s32.totalorder %s17, 3
      %p56 = por %p54, %p55
      %p57 = scmp.ne.s32.totalorder %s46, %s47
      %p58 = scmp.eq.s32.totalorder %s17, 0
      %p59 = por %p57, %p58
      %p60 = scmp.ne.s32.totalorder %s46, %s47
      %p61 = scmp.eq.s32.totalorder %s18, 3
      %p62 = por %p60, %p61
      %p64 = scmp.ne.s32.totalorder %s47, %s63
      %p65 = scmp.eq.s32.totalorder %s18, 0
      %p66 = por %p64, %p65
      %s68 = sadd.s32 %s67, 1
      %p71 = scmp.eq.s32.totalorder %s12, 3
      %p72 = scmp.ne.s32.totalorder %s67, %s69
      %p73 = scmp.eq.s32.totalorder %s12, 0
      %p74 = por %p72, %p73
      %p75 = scmp.ne.s32.totalorder %s67, %s69
      %p76 = scmp.eq.s32.totalorder %s17, 3
      %p77 = por %p75, %p76
      %p78 = scmp.ne.s32.totalorder %s69, %s70
      %p79 = scmp.eq.s32.totalorder %s17, 0
      %p80 = por %p78, %p79
      %p81 = scmp.ne.s32.totalorder %s69, %s70
      %p82 = scmp.eq.s32.totalorder %s18, 3
      %p83 = por %p81, %p82
      %p85 = scmp.ne.s32.totalorder %s70, %s84
      %p86 = scmp.eq.s32.totalorder %s18, 0
      %p87 = por %p85, %p86
      %s89 = sadd.s32 %s88, 1
      %p92 = scmp.eq.s32.totalorder %s12, 3
      %p93 = scmp.ne.s32.totalorder %s88, %s90
      %p94 = scmp.eq.s32.totalorder %s12, 0
      %p95 = por %p93, %p94
      %p96 = scmp.ne.s32.totalorder %s88, %s90
      %p97 = scmp.eq.s32.totalorder %s17, 3
      %p98 = por %p96, %p97
      %p99 = scmp.ne.s32.totalorder %s90, %s91
      %p100 = scmp.eq.s32.totalorder %s17, 0
      %p101 = por %p99, %p100
      %p102 = scmp.ne.s32.totalorder %s90, %s91
      %p103 = scmp.eq.s32.totalorder %s18, 3
      %p104 = por %p102, %p103
      %p106 = scmp.ne.s32.totalorder %s91, %s105
      %p107 = scmp.eq.s32.totalorder %s18, 0
      %p108 = por %p106, %p107
      %s109 = ssub.s32 %s12, %s19
      %p110 = scmp.eq.s32.totalorder %s109, 0
      %s112 = sadd.s32 %s111, 1
      %s113 = scalar_select %p110, %s111, %s112
      %p116 = pneg %p110
      %p117 = scmp.eq.s32.totalorder %s12, 3
      %p118 = por %p116, %p117
      %p119 = scmp.ne.s32.totalorder %s111, %s114
      %p120 = scmp.eq.s32.totalorder %s12, 0
      %p121 = por %p119, %p120
      %p122 = scmp.ne.s32.totalorder %s111, %s114
      %p123 = scmp.eq.s32.totalorder %s17, 3
      %p124 = por %p122, %p123
      %p125 = scmp.ne.s32.totalorder %s114, %s115
      %p126 = scmp.eq.s32.totalorder %s17, 0
      %p127 = por %p125, %p126
      %p128 = scmp.ne.s32.totalorder %s114, %s115
      %p129 = scmp.eq.s32.totalorder %s18, 3
      %p130 = por %p128, %p129
      %p132 = scmp.ne.s32.totalorder %s115, %s131
      %p133 = scmp.eq.s32.totalorder %s18, 0
      %p134 = por %p132, %p133
      %s135 = ssub.s32 %s12, %s19
      %p136 = scmp.eq.s32.totalorder %s135, 0
      %s138 = sadd.s32 %s137, 1
      %s139 = scalar_select %p136, %s137, %s138
      %p142 = pneg %p136
      %p143 = scmp.eq.s32.totalorder %s12, 3
      %p144 = por %p142, %p143
      %p145 = scmp.ne.s32.totalorder %s137, %s140
      %p146 = scmp.eq.s32.totalorder %s12, 0
      %p147 = por %p145, %p146
      %p148 = scmp.ne.s32.totalorder %s137, %s140
      %p149 = scmp.eq.s32.totalorder %s17, 3
      %p150 = por %p148, %p149
      %p151 = scmp.ne.s32.totalorder %s140, %s141
      %p152 = scmp.eq.s32.totalorder %s17, 0
      %p153 = por %p151, %p152
      %p154 = scmp.ne.s32.totalorder %s140, %s141
      %p155 = scmp.eq.s32.totalorder %s18, 3
      %p156 = por %p154, %p155
      %p158 = scmp.ne.s32.totalorder %s141, %s157
      %p159 = scmp.eq.s32.totalorder %s18, 0
      %p160 = por %p158, %p159
      %p161 = scmp.le.s32.totalorder 1, %s12
      %p162 = scmp.lt.s32.totalorder %s12, 5
      %p163 = pnand %p161, %p162
      %p164 = pneg %p163
      // Predicated region
      $region9: #{mixed_op.1} parent=5 // pred_check
        _
      $region10: #{mixed_op.1} parent=5 // pred_check_branch
        %166 = sbr.rel (%p163) target = $region12
      $region11: #{mixed_op.1} parent=5 // pred_region
        %s167 = ssub.s32 %s12, 1
        // Predicated region
        $region13: #{mixed_op.1} parent=11 // pred_check
          %p168 = pneg %p33
        $region14: #{mixed_op.1} parent=11 // pred_check_branch
          %170 = sbr.rel (%p168) target = $region16
        $region15: #{mixed_op.1} parent=11 // pred_region
          %s172 = ssub.s32 16, 16
          %173 = vsyncadd [#allocation3], %s172
          %s175 = sshll.u32 %s0, 4
          %s176 = int_to_ptr.vmem [resolvable:$true] %s175
          %178 = dma.vmem_to_smem %s176, 16, [#allocation2], [#allocation3]
        $region16: #{mixed_op.1} parent=11 // pred_fallthru
          _
        // Predicated region
        $region17: #{mixed_op.1} parent=11 // pred_check
          %p179 = pneg %p80
        $region18: #{mixed_op.1} parent=11 // pred_check_branch
          %181 = sbr.rel (%p179) target = $region20
        $region19: #{mixed_op.1} parent=11 // pred_region
          _
        $region20: #{mixed_op.1} parent=11 // pred_fallthru
          _
        // Predicated region
        $region21: #{mixed_op.1} parent=11 // pred_check
          %p182 = pneg %p101
        $region22: #{mixed_op.1} parent=11 // pred_check_branch
          %184 = sbr.rel (%p182) target = $region24
        $region23: #{mixed_op.1} parent=11 // pred_region
          _
        $region24: #{mixed_op.1} parent=11 // pred_fallthru
          _
      $region12: #{mixed_op.1} parent=5 // pred_fallthru
        _
      %p185 = scmp.lt.s32.totalorder %s12, 4
      // Predicated region
      $region25: #{mixed_op.1} parent=5 // pred_check
        %p186 = pneg %p185
      $region26: #{mixed_op.1} parent=5 // pred_check_branch
        %188 = sbr.rel (%p186) target = $region28
      $region27: #{mixed_op.1} parent=5 // pred_region
        // Predicated region
        $region29: #{mixed_op.1} parent=27 // pred_check
          %p189 = pneg %p53
        $region30: #{mixed_op.1} parent=27 // pred_check_branch
          %191 = sbr.rel (%p189) target = $region32
        $region31: #{mixed_op.1} parent=27 // pred_region
          %p192 = scmp.lt.s32.totalorder %s12, 3
          %s193 = scalar_select %p192, %s12, 3
          %s194 = smul.addr %s193, 30
          %s195 = smul.addr %s194, 4
          %s196 = scalar_lea.vmem %s1, %s195
        $region32: #{mixed_op.1} parent=27 // pred_fallthru
          _
        // Predicated region
        $region33: #{mixed_op.1} parent=27 // pred_check
          %p197 = pneg %p121
        $region34: #{mixed_op.1} parent=27 // pred_check_branch
          %199 = sbr.rel (%p197) target = $region36
        $region35: #{mixed_op.1} parent=27 // pred_region
          %p200 = scmp.lt.s32.totalorder %s12, 3
          %s201 = scalar_select %p200, %s12, 3
          %s202 = smul.addr %s201, 16
          %s203 = smul.addr %s202, 8
          %s204 = scalar_lea.vmem %s4, %s203
        $region36: #{mixed_op.1} parent=27 // pred_fallthru
          _
      $region28: #{mixed_op.1} parent=5 // pred_fallthru
        _
      %p205 = scmp.le.s32.totalorder 1, %s12
      %p206 = scmp.lt.s32.totalorder %s12, 5
      %p207 = pnand %p205, %p206
      %p208 = pneg %p207
      // Predicated region
      $region37: #{mixed_op.1} parent=5 // pred_check
        _
      $region38: #{mixed_op.1} parent=5 // pred_check_branch
        %210 = sbr.rel (%p207) target = $region40
      $region39: #{mixed_op.1} parent=5 // pred_region
        %s211 = ssub.s32 %s12, 1
        // Predicated region
        $region41: #{mixed_op.1} parent=39 // pred_check
          %p212 = pneg %p33
        $region42: #{mixed_op.1} parent=39 // pred_check_branch
          %214 = sbr.rel (%p212) target = $region44
        $region43: #{mixed_op.1} parent=39 // pred_region
          %215 = dma.done [#allocation3], 16
        $region44: #{mixed_op.1} parent=39 // pred_fallthru
          _
        %216 = sfence
        %p217 = pneg %p33
        %p218 = pneg %p30
        %p219 = scmp.lt.s32.totalorder %s17, 3
        %s220 = scalar_select %p219, %s17, 3
        %s221 = smul.addr %s220, 30
        %s222 = smul.addr %s221, 4
        %s223 = scalar_lea.vmem %s1, %s222
        %p224 = pneg %p59
        %p225 = pneg %p56
        %p226 = pneg %p80
        %p227 = pneg %p77
        %p228 = pneg %p101
        %p229 = pneg %p98
        %p230 = scmp.lt.s32.totalorder %s17, 3
        %s231 = scalar_select %p230, %s17, 3
        %s232 = smul.addr %s231, 16
        %s233 = smul.addr %s232, 8
        %s234 = scalar_lea.vmem %s4, %s233
        %p235 = pneg %p127
        %p236 = pneg %p124
        %p237 = pneg %p153
        %p238 = pneg %p150
        %p239 = scmp.lt.s32.totalorder %s17, 3
        %s240 = scalar_select %p239, %s17, 3
        %s241 = smul.addr %s240, 16
        %s242 = smul.addr %s241, 8
        %s243 = scalar_lea.vmem %s5, %s242
        %p244 = scmp.lt.s32.totalorder %s17, 3
        %s245 = scalar_select %p244, %s17, 3
        %s246 = smul.addr %s245, 30
        %s247 = smul.addr %s246, 4
        %s248 = scalar_lea.vmem %s1, %s247
        %p249 = scmp.lt.s32.totalorder %s17, 3
        %s250 = scalar_select %p249, %s17, 3
        %s251 = smul.addr %s250, 16
        %s252 = smul.addr %s251, 8
        %s253 = scalar_lea.vmem %s4, %s252
        %p254 = scmp.lt.s32.totalorder %s17, 3
        %s255 = scalar_select %p254, %s17, 3
        %s256 = smul.addr %s255, 16
        %s257 = smul.addr %s256, 8
        %s258 = scalar_lea.vmem %s5, %s257
        %s260 = sld [smem:[#allocation2 + $0x1]]
        %v261 = vld [vmem:[%s253] sm:$0xff]
        %v262 = vld [vmem:[%s253 + $0x8] sm:$0xff]
        %v263 = vld [vmem:[%s253 + $0x10] sm:$0xff]
        %v264 = vld [vmem:[%s253 + $0x18] sm:$0xff]
        %v265 = vld [vmem:[%s253 + $0x20] sm:$0xff]
        %v266 = vld [vmem:[%s253 + $0x28] sm:$0xff]
        %v267 = vld [vmem:[%s253 + $0x30] sm:$0xff]
        %v268 = vld [vmem:[%s253 + $0x38] sm:$0xff]
        %v269 = vld [vmem:[%s253 + $0x40] sm:$0xff]
        %v270 = vld [vmem:[%s253 + $0x48] sm:$0xff]
        %v271 = vld [vmem:[%s253 + $0x50] sm:$0xff]
        %v272 = vld [vmem:[%s253 + $0x58] sm:$0xff]
        %v273 = vld [vmem:[%s253 + $0x60] sm:$0xff]
        %v274 = vld [vmem:[%s253 + $0x68] sm:$0xff]
        %v275 = vld [vmem:[%s253 + $0x70] sm:$0xff]
        %v276 = vld [vmem:[%s253 + $0x78] sm:$0xff]
        %v277 = vld [vmem:[%s3] sm:$0x1]
        %v279 = vlaneseq
        %v280 = vshrl.u32 %v279, 7
        %v281 = vsub.s32 0, %v280
        %v282 = vrot.slane %v277, %v281
        %v284 = vadd.f32 %v282, 0.0
        %v285 = vld [vmem:[%s248] sm:$0xf]
        %v286 = vld [vmem:[%s248 + $0x4] sm:$0xf]
        %v287 = vld [vmem:[%s248 + $0x8] sm:$0x1]
        %v288 = vld [vmem:[%s248 + $0xc] sm:$0xf]
        %v289 = vld [vmem:[%s248 + $0x10] sm:$0xf]
        %v290 = vld [vmem:[%s248 + $0x14] sm:$0x1]
        %v291 = vld [vmem:[%s248 + $0x18] sm:$0xf]
        %v292 = vld [vmem:[%s248 + $0x1c] sm:$0xf]
        %v293 = vld [vmem:[%s248 + $0x20] sm:$0x1]
        %v294 = vld [vmem:[%s248 + $0x24] sm:$0xf]
        %v295 = vld [vmem:[%s248 + $0x28] sm:$0xf]
        %v296 = vld [vmem:[%s248 + $0x2c] sm:$0x1]
        %v297 = vld [vmem:[%s248 + $0x30] sm:$0xf]
        %v298 = vld [vmem:[%s248 + $0x34] sm:$0xf]
        %v299 = vld [vmem:[%s248 + $0x38] sm:$0x1]
        %v300 = vld [vmem:[%s248 + $0x3c] sm:$0xf]
        %v301 = vld [vmem:[%s248 + $0x40] sm:$0xf]
        %v302 = vld [vmem:[%s248 + $0x44] sm:$0x1]
        %v303 = vld [vmem:[%s248 + $0x48] sm:$0xf]
        %v304 = vld [vmem:[%s248 + $0x4c] sm:$0xf]
        %v305 = vld [vmem:[%s248 + $0x50] sm:$0x1]
        %v306 = vld [vmem:[%s248 + $0x54] sm:$0xf]
        %v307 = vld [vmem:[%s248 + $0x58] sm:$0xf]
        %v308 = vld [vmem:[%s248 + $0x5c] sm:$0x1]
        %v309 = vunpack.c.l.bf16 %v285
        %v310 = vunpack.c.l.bf16 %v286
        %v311 = vunpack.c.l.bf16 %v287
        %v312 = vunpack.c.l.bf16 %v288
        %v313 = vunpack.c.l.bf16 %v289
        %v314 = vunpack.c.l.bf16 %v290
        %v315 = vunpack.c.l.bf16 %v291
        %v316 = vunpack.c.l.bf16 %v292
        %v317 = vunpack.c.l.bf16 %v293
        %v318 = vunpack.c.l.bf16 %v294
        %v319 = vunpack.c.l.bf16 %v295
        %v320 = vunpack.c.l.bf16 %v296
        %v321 = vunpack.c.l.bf16 %v297
        %v322 = vunpack.c.l.bf16 %v298
        %v323 = vunpack.c.l.bf16 %v299
        %v324 = vunpack.c.l.bf16 %v300
        %v325 = vunpack.c.l.bf16 %v301
        %v326 = vunpack.c.l.bf16 %v302
        %v327 = vunpack.c.l.bf16 %v303
        %v328 = vunpack.c.l.bf16 %v304
        %v329 = vunpack.c.l.bf16 %v305
        %v330 = vunpack.c.l.bf16 %v306
        %v331 = vunpack.c.l.bf16 %v307
        %v332 = vunpack.c.l.bf16 %v308
        %334 = vset.pattern.permute.xlu0 0
        %335 = vperm.xlu0 %334, %v261
        %v336 = vpop.permute.xlu0 %335
        %339 = vset.pattern.permute.xlu0 0
        %340 = vperm.xlu0 %339, %v262
        %v341 = vpop.permute.xlu0 %340
        %344 = vset.pattern.permute.xlu0 0
        %345 = vperm.xlu0 %344, %v263
        %v346 = vpop.permute.xlu0 %345
        %349 = vset.pattern.permute.xlu0 0
        %350 = vperm.xlu0 %349, %v264
        %v351 = vpop.permute.xlu0 %350
        %354 = vset.pattern.permute.xlu0 0
        %355 = vperm.xlu0 %354, %v265
        %v356 = vpop.permute.xlu0 %355
        %359 = vset.pattern.permute.xlu0 0
        %360 = vperm.xlu0 %359, %v266
        %v361 = vpop.permute.xlu0 %360
        %364 = vset.pattern.permute.xlu0 0
        %365 = vperm.xlu0 %364, %v267
        %v366 = vpop.permute.xlu0 %365
        %369 = vset.pattern.permute.xlu0 0
        %370 = vperm.xlu0 %369, %v268
        %v371 = vpop.permute.xlu0 %370
        %374 = vset.pattern.permute.xlu0 0
        %375 = vperm.xlu0 %374, %v269
        %v376 = vpop.permute.xlu0 %375
        %379 = vset.pattern.permute.xlu0 0
        %380 = vperm.xlu0 %379, %v270
        %v381 = vpop.permute.xlu0 %380
        %384 = vset.pattern.permute.xlu0 0
        %385 = vperm.xlu0 %384, %v271
        %v386 = vpop.permute.xlu0 %385
        %389 = vset.pattern.permute.xlu0 0
        %390 = vperm.xlu0 %389, %v272
        %v391 = vpop.permute.xlu0 %390
        %394 = vset.pattern.permute.xlu0 0
        %395 = vperm.xlu0 %394, %v273
        %v396 = vpop.permute.xlu0 %395
        %399 = vset.pattern.permute.xlu0 0
        %400 = vperm.xlu0 %399, %v274
        %v401 = vpop.permute.xlu0 %400
        %404 = vset.pattern.permute.xlu0 0
        %405 = vperm.xlu0 %404, %v275
        %v406 = vpop.permute.xlu0 %405
        %409 = vset.pattern.permute.xlu0 0
        %410 = vperm.xlu0 %409, %v276
        %v411 = vpop.permute.xlu0 %410
        %v413 = vmul.f32 %v309, %v336
        %v414 = vmul.f32 %v310, %v341
        %v415 = vmul.f32 %v312, %v346
        %v416 = vmul.f32 %v313, %v351
        %v417 = vmul.f32 %v315, %v356
        %v418 = vmul.f32 %v316, %v361
        %v419 = vmul.f32 %v318, %v366
        %v420 = vmul.f32 %v319, %v371
        %v421 = vmul.f32 %v321, %v376
        %v422 = vmul.f32 %v322, %v381
        %v423 = vmul.f32 %v324, %v386
        %v424 = vmul.f32 %v325, %v391
        %v425 = vmul.f32 %v327, %v396
        %v426 = vmul.f32 %v328, %v401
        %v427 = vmul.f32 %v330, %v406
        %v428 = vmul.f32 %v331, %v411
        %v429 = vadd.f32 %v284, %v413
        %v430 = vadd.f32 %v284, %v414
        %v431 = vadd.f32 %v284, %v415
        %v432 = vadd.f32 %v284, %v416
        %v433 = vadd.f32 %v284, %v417
        %v434 = vadd.f32 %v284, %v418
        %v435 = vadd.f32 %v284, %v419
        %v436 = vadd.f32 %v284, %v420
        %v437 = vadd.f32 %v284, %v421
        %v438 = vadd.f32 %v284, %v422
        %v439 = vadd.f32 %v284, %v423
        %v440 = vadd.f32 %v284, %v424
        %v441 = vadd.f32 %v284, %v425
        %v442 = vadd.f32 %v284, %v426
        %v443 = vadd.f32 %v284, %v427
        %v444 = vadd.f32 %v284, %v428
        %v445 = vmax.f32 %v309, 0.0
        %v446 = vmax.f32 %v310, 0.0
        %v447 = vmax.f32 %v312, 0.0
        %v448 = vmax.f32 %v313, 0.0
        %v449 = vmax.f32 %v315, 0.0
        %v450 = vmax.f32 %v316, 0.0
        %v451 = vmax.f32 %v318, 0.0
        %v452 = vmax.f32 %v319, 0.0
        %v453 = vmax.f32 %v321, 0.0
        %v454 = vmax.f32 %v322, 0.0
        %v455 = vmax.f32 %v324, 0.0
        %v456 = vmax.f32 %v325, 0.0
        %v457 = vmax.f32 %v327, 0.0
        %v458 = vmax.f32 %v328, 0.0
        %v459 = vmax.f32 %v330, 0.0
        %v460 = vmax.f32 %v331, 0.0
        %v461 = vpack.c.bf16 %v446, %v445
        %v462 = vpack.c.bf16 %v448, %v447
        %v463 = vpack.c.bf16 %v450, %v449
        %v464 = vpack.c.bf16 %v452, %v451
        %v465 = vpack.c.bf16 %v454, %v453
        %v466 = vpack.c.bf16 %v456, %v455
        %v467 = vpack.c.bf16 %v458, %v457
        %v468 = vpack.c.bf16 %v460, %v459
        %v469 = vld [vmem:[%s2] sm:$0x3]
        %vm470 = vcmask 31744
        %v472 = vsel %vm470, %v461, 0
        %v475 = vsel %vm470, %v462, 0
        %v478 = vsel %vm470, %v463, 0
        %v481 = vsel %vm470, %v464, 0
        %v484 = vsel %vm470, %v465, 0
        %v487 = vsel %vm470, %v466, 0
        %v490 = vsel %vm470, %v467, 0
        %v493 = vsel %vm470, %v468, 0
        %vm495 = vcmask 1041408
        %v497 = vsel %vm495, %v469, 0
        %499 = vmatprep.subr.bf16.mxu0 0
        %500 = vmatpush1.bf16.msra.mxu0 0
        %501 = vmatprep.subr.bf16.mxu0 0
        %502 = vmatpush1.bf16.msra.mxu0 0
        %503 = vmatprep.subr.bf16.mxu0 0
        %504 = vmatpush1.bf16.msra.mxu0 0
        %505 = vmatprep.subr.bf16.mxu0 0
        %506 = vmatpush1.bf16.msra.mxu0 0
        %507 = vmatprep.subr.bf16.mxu0 0
        %508 = vmatpush1.bf16.msra.mxu0 0
        %509 = vmatprep.subr.bf16.mxu0 0
        %510 = vmatpush1.bf16.msra.mxu0 0
        %511 = vmatprep.subr.bf16.mxu0 0
        %512 = vmatpush1.bf16.msra.mxu0 0
        %513 = vmatprep.subr.bf16.mxu0 0
        %514 = vmatpush1.bf16.msra.mxu0 %v497
        %515 = vmatprep.subr.bf16.mxu0 0
        %516 = vmatpush2.bf16.msra.mxu0 0
        %517 = vmatprep.subr.bf16.mxu0 0
        %518 = vmatpush2.bf16.msra.mxu0 0
        %519 = vmatprep.subr.bf16.mxu0 0
        %520 = vmatpush2.bf16.msra.mxu0 0
        %521 = vmatprep.subr.bf16.mxu0 0
        %522 = vmatpush2.bf16.msra.mxu0 0
        %523 = vmatprep.subr.bf16.mxu0 0
        %524 = vmatpush2.bf16.msra.mxu0 0
        %525 = vmatprep.subr.bf16.mxu0 0
        %526 = vmatpush2.bf16.msra.mxu0 0
        %527 = vmatprep.subr.bf16.mxu0 0
        %528 = vmatpush2.bf16.msra.mxu0 0
        %529 = vmatprep.subr.bf16.mxu0 0
        %530 = vmatpush2.bf16.msra.mxu0 0
        %531 = vmatprep.mubr.bf16.mxu0 0
        %532 = vmatmul.mubr.bf16.gmra.mxu0 %v472
        %v533 = vpop.f32.mrf.mxu0
        %v534 = vadd.f32 0.0, %v533
        %v535 = vpop.f32.mrf.mxu0
        %v536 = vpop.f32.mrf.mxu0
        %v537 = vadd.f32 0.0, %v536
        %v538 = vpop.f32.mrf.mxu0
        %539 = vmatprep.mubr.bf16.mxu0 0
        %540 = vmatmul.mubr.bf16.gmra.mxu0 %v475
        %v541 = vpop.f32.mrf.mxu0
        %v542 = vadd.f32 0.0, %v541
        %v543 = vpop.f32.mrf.mxu0
        %v544 = vpop.f32.mrf.mxu0
        %v545 = vadd.f32 0.0, %v544
        %v546 = vpop.f32.mrf.mxu0
        %547 = vmatprep.mubr.bf16.mxu0 0
        %548 = vmatmul.mubr.bf16.gmra.mxu0 %v478
        %v549 = vpop.f32.mrf.mxu0
        %v550 = vadd.f32 0.0, %v549
        %v551 = vpop.f32.mrf.mxu0
        %v552 = vpop.f32.mrf.mxu0
        %v553 = vadd.f32 0.0, %v552
        %v554 = vpop.f32.mrf.mxu0
        %555 = vmatprep.mubr.bf16.mxu0 0
        %556 = vmatmul.mubr.bf16.gmra.mxu0 %v481
        %v557 = vpop.f32.mrf.mxu0
        %v558 = vadd.f32 0.0, %v557
        %v559 = vpop.f32.mrf.mxu0
        %v560 = vpop.f32.mrf.mxu0
        %v561 = vadd.f32 0.0, %v560
        %v562 = vpop.f32.mrf.mxu0
        %563 = vmatprep.mubr.bf16.mxu0 0
        %564 = vmatmul.mubr.bf16.gmra.mxu0 %v484
        %v565 = vpop.f32.mrf.mxu0
        %v566 = vadd.f32 0.0, %v565
        %v567 = vpop.f32.mrf.mxu0
        %v568 = vpop.f32.mrf.mxu0
        %v569 = vadd.f32 0.0, %v568
        %v570 = vpop.f32.mrf.mxu0
        %571 = vmatprep.mubr.bf16.mxu0 0
        %572 = vmatmul.mubr.bf16.gmra.mxu0 %v487
        %v573 = vpop.f32.mrf.mxu0
        %v574 = vadd.f32 0.0, %v573
        %v575 = vpop.f32.mrf.mxu0
        %v576 = vpop.f32.mrf.mxu0
        %v577 = vadd.f32 0.0, %v576
        %v578 = vpop.f32.mrf.mxu0
        %579 = vmatprep.mubr.bf16.mxu0 0
        %580 = vmatmul.mubr.bf16.gmra.mxu0 %v490
        %v581 = vpop.f32.mrf.mxu0
        %v582 = vadd.f32 0.0, %v581
        %v583 = vpop.f32.mrf.mxu0
        %v584 = vpop.f32.mrf.mxu0
        %v585 = vadd.f32 0.0, %v584
        %v586 = vpop.f32.mrf.mxu0
        %587 = vmatprep.mubr.bf16.mxu0 0
        %588 = vmatmul.mubr.bf16.gmra.mxu0 %v493
        %v589 = vpop.f32.mrf.mxu0
        %v590 = vadd.f32 0.0, %v589
        %v591 = vpop.f32.mrf.mxu0
        %v592 = vpop.f32.mrf.mxu0
        %v593 = vadd.f32 0.0, %v592
        %v594 = vpop.f32.mrf.mxu0
        %595 = vdwg.mxu0
        %v596 = vadd.f32 %v429, %v534
        %v597 = vadd.f32 %v430, %v537
        %v598 = vadd.f32 %v431, %v542
        %v599 = vadd.f32 %v432, %v545
        %v600 = vadd.f32 %v433, %v550
        %v601 = vadd.f32 %v434, %v553
        %v602 = vadd.f32 %v435, %v558
        %v603 = vadd.f32 %v436, %v561
        %v604 = vadd.f32 %v437, %v566
        %v605 = vadd.f32 %v438, %v569
        %v606 = vadd.f32 %v439, %v574
        %v607 = vadd.f32 %v440, %v577
        %v608 = vadd.f32 %v441, %v582
        %v609 = vadd.f32 %v442, %v585
        %v610 = vadd.f32 %v443, %v590
        %v611 = vadd.f32 %v444, %v593
        %vm636 = vcmask 1046528
        %v637 = vrot.slane %v309, 1
        %v638 = vrot.slane %v310, 1
        %v639 = vsel %vm636, %v637, %v638
        %v640 = vrot.slane %v311, 1
        %v641 = vsel %vm636, %v638, %v640
        %v642 = vrot.slane %v312, 1
        %v643 = vrot.slane %v313, 1
        %v644 = vsel %vm636, %v642, %v643
        %v645 = vrot.slane %v314, 1
        %v646 = vsel %vm636, %v643, %v645
        %v647 = vrot.slane %v315, 1
        %v648 = vrot.slane %v316, 1
        %v649 = vsel %vm636, %v647, %v648
        %v650 = vrot.slane %v317, 1
        %v651 = vsel %vm636, %v648, %v650
        %v652 = vrot.slane %v318, 1
        %v653 = vrot.slane %v319, 1
        %v654 = vsel %vm636, %v652, %v653
        %v655 = vrot.slane %v320, 1
        %v656 = vsel %vm636, %v653, %v655
        %v657 = vrot.slane %v321, 1
        %v658 = vrot.slane %v322, 1
        %v659 = vsel %vm636, %v657, %v658
        %v660 = vrot.slane %v323, 1
        %v661 = vsel %vm636, %v658, %v660
        %v662 = vrot.slane %v324, 1
        %v663 = vrot.slane %v325, 1
        %v664 = vsel %vm636, %v662, %v663
        %v665 = vrot.slane %v326, 1
        %v666 = vsel %vm636, %v663, %v665
        %v667 = vrot.slane %v327, 1
        %v668 = vrot.slane %v328, 1
        %v669 = vsel %vm636, %v667, %v668
        %v670 = vrot.slane %v329, 1
        %v671 = vsel %vm636, %v668, %v670
        %v672 = vrot.slane %v330, 1
        %v673 = vrot.slane %v331, 1
        %v674 = vsel %vm636, %v672, %v673
        %v675 = vrot.slane %v332, 1
        %v676 = vsel %vm636, %v673, %v675
        %v693 = vmul.f32 %v639, %v336
        %v694 = vmul.f32 %v641, %v341
        %v695 = vmul.f32 %v644, %v346
        %v696 = vmul.f32 %v646, %v351
        %v697 = vmul.f32 %v649, %v356
        %v698 = vmul.f32 %v651, %v361
        %v699 = vmul.f32 %v654, %v366
        %v700 = vmul.f32 %v656, %v371
        %v701 = vmul.f32 %v659, %v376
        %v702 = vmul.f32 %v661, %v381
        %v703 = vmul.f32 %v664, %v386
        %v704 = vmul.f32 %v666, %v391
        %v705 = vmul.f32 %v669, %v396
        %v706 = vmul.f32 %v671, %v401
        %v707 = vmul.f32 %v674, %v406
        %v708 = vmul.f32 %v676, %v411
        %v709 = vadd.f32 %v596, %v693
        %v710 = vadd.f32 %v597, %v694
        %v711 = vadd.f32 %v598, %v695
        %v712 = vadd.f32 %v599, %v696
        %v713 = vadd.f32 %v600, %v697
        %v714 = vadd.f32 %v601, %v698
        %v715 = vadd.f32 %v602, %v699
        %v716 = vadd.f32 %v603, %v700
        %v717 = vadd.f32 %v604, %v701
        %v718 = vadd.f32 %v605, %v702
        %v719 = vadd.f32 %v606, %v703
        %v720 = vadd.f32 %v607, %v704
        %v721 = vadd.f32 %v608, %v705
        %v722 = vadd.f32 %v609, %v706
        %v723 = vadd.f32 %v610, %v707
        %v724 = vadd.f32 %v611, %v708
        %v725 = vmax.f32 %v639, 0.0
        %v726 = vmax.f32 %v641, 0.0
        %v727 = vmax.f32 %v644, 0.0
        %v728 = vmax.f32 %v646, 0.0
        %v729 = vmax.f32 %v649, 0.0
        %v730 = vmax.f32 %v651, 0.0
        %v731 = vmax.f32 %v654, 0.0
        %v732 = vmax.f32 %v656, 0.0
        %v733 = vmax.f32 %v659, 0.0
        %v734 = vmax.f32 %v661, 0.0
        %v735 = vmax.f32 %v664, 0.0
        %v736 = vmax.f32 %v666, 0.0
        %v737 = vmax.f32 %v669, 0.0
        %v738 = vmax.f32 %v671, 0.0
        %v739 = vmax.f32 %v674, 0.0
        %v740 = vmax.f32 %v676, 0.0
        %v741 = vpack.c.bf16 %v726, %v725
        %v742 = vpack.c.bf16 %v728, %v727
        %v743 = vpack.c.bf16 %v730, %v729
        %v744 = vpack.c.bf16 %v732, %v731
        %v745 = vpack.c.bf16 %v734, %v733
        %v746 = vpack.c.bf16 %v736, %v735
        %v747 = vpack.c.bf16 %v738, %v737
        %v748 = vpack.c.bf16 %v740, %v739
        %s749 = scalar_lea.vmem %s2, 2
        %v750 = vld [vmem:[%s749] sm:$0x3]
        %v752 = vsel %vm470, %v741, 0
        %v755 = vsel %vm470, %v742, 0
        %v758 = vsel %vm470, %v743, 0
        %v761 = vsel %vm470, %v744, 0
        %v764 = vsel %vm470, %v745, 0
        %v767 = vsel %vm470, %v746, 0
        %v770 = vsel %vm470, %v747, 0
        %v773 = vsel %vm470, %v748, 0
        %v776 = vsel %vm495, %v750, 0
        %778 = vmatprep.subr.bf16.mxu0 0
        %779 = vmatpush1.bf16.msra.mxu0 0
        %780 = vmatprep.subr.bf16.mxu0 0
        %781 = vmatpush1.bf16.msra.mxu0 0
        %782 = vmatprep.subr.bf16.mxu0 0
        %783 = vmatpush1.bf16.msra.mxu0 0
        %784 = vmatprep.subr.bf16.mxu0 0
        %785 = vmatpush1.bf16.msra.mxu0 0
        %786 = vmatprep.subr.bf16.mxu0 0
        %787 = vmatpush1.bf16.msra.mxu0 0
        %788 = vmatprep.subr.bf16.mxu0 0
        %789 = vmatpush1.bf16.msra.mxu0 0
        %790 = vmatprep.subr.bf16.mxu0 0
        %791 = vmatpush1.bf16.msra.mxu0 0
        %792 = vmatprep.subr.bf16.mxu0 0
        %793 = vmatpush1.bf16.msra.mxu0 %v776
        %794 = vmatprep.subr.bf16.mxu0 0
        %795 = vmatpush2.bf16.msra.mxu0 0
        %796 = vmatprep.subr.bf16.mxu0 0
        %797 = vmatpush2.bf16.msra.mxu0 0
        %798 = vmatprep.subr.bf16.mxu0 0
        %799 = vmatpush2.bf16.msra.mxu0 0
        %800 = vmatprep.subr.bf16.mxu0 0
        %801 = vmatpush2.bf16.msra.mxu0 0
        %802 = vmatprep.subr.bf16.mxu0 0
        %803 = vmatpush2.bf16.msra.mxu0 0
        %804 = vmatprep.subr.bf16.mxu0 0
        %805 = vmatpush2.bf16.msra.mxu0 0
        %806 = vmatprep.subr.bf16.mxu0 0
        %807 = vmatpush2.bf16.msra.mxu0 0
        %808 = vmatprep.subr.bf16.mxu0 0
        %809 = vmatpush2.bf16.msra.mxu0 0
        %810 = vmatprep.mubr.bf16.mxu0 0
        %811 = vmatmul.mubr.bf16.gmra.mxu0 %v752
        %v812 = vpop.f32.mrf.mxu0
        %v813 = vadd.f32 0.0, %v812
        %v814 = vpop.f32.mrf.mxu0
        %v815 = vpop.f32.mrf.mxu0
        %v816 = vadd.f32 0.0, %v815
        %v817 = vpop.f32.mrf.mxu0
        %818 = vmatprep.mubr.bf16.mxu0 0
        %819 = vmatmul.mubr.bf16.gmra.mxu0 %v755
        %v820 = vpop.f32.mrf.mxu0
        %v821 = vadd.f32 0.0, %v820
        %v822 = vpop.f32.mrf.mxu0
        %v823 = vpop.f32.mrf.mxu0
        %v824 = vadd.f32 0.0, %v823
        %v825 = vpop.f32.mrf.mxu0
        %826 = vmatprep.mubr.bf16.mxu0 0
        %827 = vmatmul.mubr.bf16.gmra.mxu0 %v758
        %v828 = vpop.f32.mrf.mxu0
        %v829 = vadd.f32 0.0, %v828
        %v830 = vpop.f32.mrf.mxu0
        %v831 = vpop.f32.mrf.mxu0
        %v832 = vadd.f32 0.0, %v831
        %v833 = vpop.f32.mrf.mxu0
        %834 = vmatprep.mubr.bf16.mxu0 0
        %835 = vmatmul.mubr.bf16.gmra.mxu0 %v761
        %v836 = vpop.f32.mrf.mxu0
        %v837 = vadd.f32 0.0, %v836
        %v838 = vpop.f32.mrf.mxu0
        %v839 = vpop.f32.mrf.mxu0
        %v840 = vadd.f32 0.0, %v839
        %v841 = vpop.f32.mrf.mxu0
        %842 = vmatprep.mubr.bf16.mxu0 0
        %843 = vmatmul.mubr.bf16.gmra.mxu0 %v764
        %v844 = vpop.f32.mrf.mxu0
        %v845 = vadd.f32 0.0, %v844
        %v846 = vpop.f32.mrf.mxu0
        %v847 = vpop.f32.mrf.mxu0
        %v848 = vadd.f32 0.0, %v847
        %v849 = vpop.f32.mrf.mxu0
        %850 = vmatprep.mubr.bf16.mxu0 0
        %851 = vmatmul.mubr.bf16.gmra.mxu0 %v767
        %v852 = vpop.f32.mrf.mxu0
        %v853 = vadd.f32 0.0, %v852
        %v854 = vpop.f32.mrf.mxu0
        %v855 = vpop.f32.mrf.mxu0
        %v856 = vadd.f32 0.0, %v855
        %v857 = vpop.f32.mrf.mxu0
        %858 = vmatprep.mubr.bf16.mxu0 0
        %859 = vmatmul.mubr.bf16.gmra.mxu0 %v770
        %v860 = vpop.f32.mrf.mxu0
        %v861 = vadd.f32 0.0, %v860
        %v862 = vpop.f32.mrf.mxu0
        %v863 = vpop.f32.mrf.mxu0
        %v864 = vadd.f32 0.0, %v863
        %v865 = vpop.f32.mrf.mxu0
        %866 = vmatprep.mubr.bf16.mxu0 0
        %867 = vmatmul.mubr.bf16.gmra.mxu0 %v773
        %v868 = vpop.f32.mrf.mxu0
        %v869 = vadd.f32 0.0, %v868
        %v870 = vpop.f32.mrf.mxu0
        %v871 = vpop.f32.mrf.mxu0
        %v872 = vadd.f32 0.0, %v871
        %v873 = vpop.f32.mrf.mxu0
        %874 = vdwg.mxu0
        %v875 = vadd.f32 %v709, %v813
        %v876 = vadd.f32 %v710, %v816
        %v877 = vadd.f32 %v711, %v821
        %v878 = vadd.f32 %v712, %v824
        %v879 = vadd.f32 %v713, %v829
        %v880 = vadd.f32 %v714, %v832
        %v881 = vadd.f32 %v715, %v837
        %v882 = vadd.f32 %v716, %v840
        %v883 = vadd.f32 %v717, %v845
        %v884 = vadd.f32 %v718, %v848
        %v885 = vadd.f32 %v719, %v853
        %v886 = vadd.f32 %v720, %v856
        %v887 = vadd.f32 %v721, %v861
        %v888 = vadd.f32 %v722, %v864
        %v889 = vadd.f32 %v723, %v869
        %v890 = vadd.f32 %v724, %v872
        %vm891 = vcmask 1045504
        %v892 = vrot.slane %v309, 2
        %v893 = vrot.slane %v310, 2
        %v894 = vsel %vm891, %v892, %v893
        %v895 = vrot.slane %v311, 2
        %v896 = vsel %vm891, %v893, %v895
        %v897 = vrot.slane %v312, 2
        %v898 = vrot.slane %v313, 2
        %v899 = vsel %vm891, %v897, %v898
        %v900 = vrot.slane %v314, 2
        %v901 = vsel %vm891, %v898, %v900
        %v902 = vrot.slane %v315, 2
        %v903 = vrot.slane %v316, 2
        %v904 = vsel %vm891, %v902, %v903
        %v905 = vrot.slane %v317, 2
        %v906 = vsel %vm891, %v903, %v905
        %v907 = vrot.slane %v318, 2
        %v908 = vrot.slane %v319, 2
        %v909 = vsel %vm891, %v907, %v908
        %v910 = vrot.slane %v320, 2
        %v911 = vsel %vm891, %v908, %v910
        %v912 = vrot.slane %v321, 2
        %v913 = vrot.slane %v322, 2
        %v914 = vsel %vm891, %v912, %v913
        %v915 = vrot.slane %v323, 2
        %v916 = vsel %vm891, %v913, %v915
        %v917 = vrot.slane %v324, 2
        %v918 = vrot.slane %v325, 2
        %v919 = vsel %vm891, %v917, %v918
        %v920 = vrot.slane %v326, 2
        %v921 = vsel %vm891, %v918, %v920
        %v922 = vrot.slane %v327, 2
        %v923 = vrot.slane %v328, 2
        %v924 = vsel %vm891, %v922, %v923
        %v925 = vrot.slane %v329, 2
        %v926 = vsel %vm891, %v923, %v925
        %v927 = vrot.slane %v330, 2
        %v928 = vrot.slane %v331, 2
        %v929 = vsel %vm891, %v927, %v928
        %v930 = vrot.slane %v332, 2
        %v931 = vsel %vm891, %v928, %v930
        %v948 = vmul.f32 %v894, %v336
        %v949 = vmul.f32 %v896, %v341
        %v950 = vmul.f32 %v899, %v346
        %v951 = vmul.f32 %v901, %v351
        %v952 = vmul.f32 %v904, %v356
        %v953 = vmul.f32 %v906, %v361
        %v954 = vmul.f32 %v909, %v366
        %v955 = vmul.f32 %v911, %v371
        %v956 = vmul.f32 %v914, %v376
        %v957 = vmul.f32 %v916, %v381
        %v958 = vmul.f32 %v919, %v386
        %v959 = vmul.f32 %v921, %v391
        %v960 = vmul.f32 %v924, %v396
        %v961 = vmul.f32 %v926, %v401
        %v962 = vmul.f32 %v929, %v406
        %v963 = vmul.f32 %v931, %v411
        %v964 = vadd.f32 %v875, %v948
        %v965 = vadd.f32 %v876, %v949
        %v966 = vadd.f32 %v877, %v950
        %v967 = vadd.f32 %v878, %v951
        %v968 = vadd.f32 %v879, %v952
        %v969 = vadd.f32 %v880, %v953
        %v970 = vadd.f32 %v881, %v954
        %v971 = vadd.f32 %v882, %v955
        %v972 = vadd.f32 %v883, %v956
        %v973 = vadd.f32 %v884, %v957
        %v974 = vadd.f32 %v885, %v958
        %v975 = vadd.f32 %v886, %v959
        %v976 = vadd.f32 %v887, %v960
        %v977 = vadd.f32 %v888, %v961
        %v978 = vadd.f32 %v889, %v962
        %v979 = vadd.f32 %v890, %v963
        %v980 = vmax.f32 %v894, 0.0
        %v981 = vmax.f32 %v896, 0.0
        %v982 = vmax.f32 %v899, 0.0
        %v983 = vmax.f32 %v901, 0.0
        %v984 = vmax.f32 %v904, 0.0
        %v985 = vmax.f32 %v906, 0.0
        %v986 = vmax.f32 %v909, 0.0
        %v987 = vmax.f32 %v911, 0.0
        %v988 = vmax.f32 %v914, 0.0
        %v989 = vmax.f32 %v916, 0.0
        %v990 = vmax.f32 %v919, 0.0
        %v991 = vmax.f32 %v921, 0.0
        %v992 = vmax.f32 %v924, 0.0
        %v993 = vmax.f32 %v926, 0.0
        %v994 = vmax.f32 %v929, 0.0
        %v995 = vmax.f32 %v931, 0.0
        %v996 = vpack.c.bf16 %v981, %v980
        %v997 = vpack.c.bf16 %v983, %v982
        %v998 = vpack.c.bf16 %v985, %v984
        %v999 = vpack.c.bf16 %v987, %v986
        %v1000 = vpack.c.bf16 %v989, %v988
        %v1001 = vpack.c.bf16 %v991, %v990
        %v1002 = vpack.c.bf16 %v993, %v992
        %v1003 = vpack.c.bf16 %v995, %v994
        %s1004 = scalar_lea.vmem %s2, 4
        %v1005 = vld [vmem:[%s1004] sm:$0x3]
        %v1007 = vsel %vm470, %v996, 0
        %v1010 = vsel %vm470, %v997, 0
        %v1013 = vsel %vm470, %v998, 0
        %v1016 = vsel %vm470, %v999, 0
        %v1019 = vsel %vm470, %v1000, 0
        %v1022 = vsel %vm470, %v1001, 0
        %v1025 = vsel %vm470, %v1002, 0
        %v1028 = vsel %vm470, %v1003, 0
        %v1031 = vsel %vm495, %v1005, 0
        %1033 = vmatprep.subr.bf16.mxu0 0
        %1034 = vmatpush1.bf16.msra.mxu0 0
        %1035 = vmatprep.subr.bf16.mxu0 0
        %1036 = vmatpush1.bf16.msra.mxu0 0
        %1037 = vmatprep.subr.bf16.mxu0 0
        %1038 = vmatpush1.bf16.msra.mxu0 0
        %1039 = vmatprep.subr.bf16.mxu0 0
        %1040 = vmatpush1.bf16.msra.mxu0 0
        %1041 = vmatprep.subr.bf16.mxu0 0
        %1042 = vmatpush1.bf16.msra.mxu0 0
        %1043 = vmatprep.subr.bf16.mxu0 0
        %1044 = vmatpush1.bf16.msra.mxu0 0
        %1045 = vmatprep.subr.bf16.mxu0 0
        %1046 = vmatpush1.bf16.msra.mxu0 0
        %1047 = vmatprep.subr.bf16.mxu0 0
        %1048 = vmatpush1.bf16.msra.mxu0 %v1031
        %1049 = vmatprep.subr.bf16.mxu0 0
        %1050 = vmatpush2.bf16.msra.mxu0 0
        %1051 = vmatprep.subr.bf16.mxu0 0
        %1052 = vmatpush2.bf16.msra.mxu0 0
        %1053 = vmatprep.subr.bf16.mxu0 0
        %1054 = vmatpush2.bf16.msra.mxu0 0
        %1055 = vmatprep.subr.bf16.mxu0 0
        %1056 = vmatpush2.bf16.msra.mxu0 0
        %1057 = vmatprep.subr.bf16.mxu0 0
        %1058 = vmatpush2.bf16.msra.mxu0 0
        %1059 = vmatprep.subr.bf16.mxu0 0
        %1060 = vmatpush2.bf16.msra.mxu0 0
        %1061 = vmatprep.subr.bf16.mxu0 0
        %1062 = vmatpush2.bf16.msra.mxu0 0
        %1063 = vmatprep.subr.bf16.mxu0 0
        %1064 = vmatpush2.bf16.msra.mxu0 0
        %1065 = vmatprep.mubr.bf16.mxu0 0
        %1066 = vmatmul.mubr.bf16.gmra.mxu0 %v1007
        %v1067 = vpop.f32.mrf.mxu0
        %v1068 = vadd.f32 0.0, %v1067
        %v1069 = vpop.f32.mrf.mxu0
        %v1070 = vpop.f32.mrf.mxu0
        %v1071 = vadd.f32 0.0, %v1070
        %v1072 = vpop.f32.mrf.mxu0
        %1073 = vmatprep.mubr.bf16.mxu0 0
        %1074 = vmatmul.mubr.bf16.gmra.mxu0 %v1010
        %v1075 = vpop.f32.mrf.mxu0
        %v1076 = vadd.f32 0.0, %v1075
        %v1077 = vpop.f32.mrf.mxu0
        %v1078 = vpop.f32.mrf.mxu0
        %v1079 = vadd.f32 0.0, %v1078
        %v1080 = vpop.f32.mrf.mxu0
        %1081 = vmatprep.mubr.bf16.mxu0 0
        %1082 = vmatmul.mubr.bf16.gmra.mxu0 %v1013
        %v1083 = vpop.f32.mrf.mxu0
        %v1084 = vadd.f32 0.0, %v1083
        %v1085 = vpop.f32.mrf.mxu0
        %v1086 = vpop.f32.mrf.mxu0
        %v1087 = vadd.f32 0.0, %v1086
        %v1088 = vpop.f32.mrf.mxu0
        %1089 = vmatprep.mubr.bf16.mxu0 0
        %1090 = vmatmul.mubr.bf16.gmra.mxu0 %v1016
        %v1091 = vpop.f32.mrf.mxu0
        %v1092 = vadd.f32 0.0, %v1091
        %v1093 = vpop.f32.mrf.mxu0
        %v1094 = vpop.f32.mrf.mxu0
        %v1095 = vadd.f32 0.0, %v1094
        %v1096 = vpop.f32.mrf.mxu0
        %1097 = vmatprep.mubr.bf16.mxu0 0
        %1098 = vmatmul.mubr.bf16.gmra.mxu0 %v1019
        %v1099 = vpop.f32.mrf.mxu0
        %v1100 = vadd.f32 0.0, %v1099
        %v1101 = vpop.f32.mrf.mxu0
        %v1102 = vpop.f32.mrf.mxu0
        %v1103 = vadd.f32 0.0, %v1102
        %v1104 = vpop.f32.mrf.mxu0
        %1105 = vmatprep.mubr.bf16.mxu0 0
        %1106 = vmatmul.mubr.bf16.gmra.mxu0 %v1022
        %v1107 = vpop.f32.mrf.mxu0
        %v1108 = vadd.f32 0.0, %v1107
        %v1109 = vpop.f32.mrf.mxu0
        %v1110 = vpop.f32.mrf.mxu0
        %v1111 = vadd.f32 0.0, %v1110
        %v1112 = vpop.f32.mrf.mxu0
        %1113 = vmatprep.mubr.bf16.mxu0 0
        %1114 = vmatmul.mubr.bf16.gmra.mxu0 %v1025
        %v1115 = vpop.f32.mrf.mxu0
        %v1116 = vadd.f32 0.0, %v1115
        %v1117 = vpop.f32.mrf.mxu0
        %v1118 = vpop.f32.mrf.mxu0
        %v1119 = vadd.f32 0.0, %v1118
        %v1120 = vpop.f32.mrf.mxu0
        %1121 = vmatprep.mubr.bf16.mxu0 0
        %1122 = vmatmul.mubr.bf16.gmra.mxu0 %v1028
        %v1123 = vpop.f32.mrf.mxu0
        %v1124 = vadd.f32 0.0, %v1123
        %v1125 = vpop.f32.mrf.mxu0
        %v1126 = vpop.f32.mrf.mxu0
        %v1127 = vadd.f32 0.0, %v1126
        %v1128 = vpop.f32.mrf.mxu0
        %1129 = vdwg.mxu0
        %v1130 = vadd.f32 %v964, %v1068
        %v1131 = vadd.f32 %v965, %v1071
        %v1132 = vadd.f32 %v966, %v1076
        %v1133 = vadd.f32 %v967, %v1079
        %v1134 = vadd.f32 %v968, %v1084
        %v1135 = vadd.f32 %v969, %v1087
        %v1136 = vadd.f32 %v970, %v1092
        %v1137 = vadd.f32 %v971, %v1095
        %v1138 = vadd.f32 %v972, %v1100
        %v1139 = vadd.f32 %v973, %v1103
        %v1140 = vadd.f32 %v974, %v1108
        %v1141 = vadd.f32 %v975, %v1111
        %v1142 = vadd.f32 %v976, %v1116
        %v1143 = vadd.f32 %v977, %v1119
        %v1144 = vadd.f32 %v978, %v1124
        %v1145 = vadd.f32 %v979, %v1127
        %s1146 = scalar_lea.vmem %s248, 12
        %v1147 = vld [vmem:[%s1146] sm:$0xf]
        %v1148 = vld [vmem:[%s1146 + $0x4] sm:$0xf]
        %v1149 = vld [vmem:[%s1146 + $0x8] sm:$0x1]
        %v1150 = vld [vmem:[%s1146 + $0xc] sm:$0xf]
        %v1151 = vld [vmem:[%s1146 + $0x10] sm:$0xf]
        %v1152 = vld [vmem:[%s1146 + $0x14] sm:$0x1]
        %v1153 = vld [vmem:[%s1146 + $0x18] sm:$0xf]
        %v1154 = vld [vmem:[%s1146 + $0x1c] sm:$0xf]
        %v1155 = vld [vmem:[%s1146 + $0x20] sm:$0x1]
        %v1156 = vld [vmem:[%s1146 + $0x24] sm:$0xf]
        %v1157 = vld [vmem:[%s1146 + $0x28] sm:$0xf]
        %v1158 = vld [vmem:[%s1146 + $0x2c] sm:$0x1]
        %v1159 = vld [vmem:[%s1146 + $0x30] sm:$0xf]
        %v1160 = vld [vmem:[%s1146 + $0x34] sm:$0xf]
        %v1161 = vld [vmem:[%s1146 + $0x38] sm:$0x1]
        %v1162 = vld [vmem:[%s1146 + $0x3c] sm:$0xf]
        %v1163 = vld [vmem:[%s1146 + $0x40] sm:$0xf]
        %v1164 = vld [vmem:[%s1146 + $0x44] sm:$0x1]
        %v1165 = vld [vmem:[%s1146 + $0x48] sm:$0xf]
        %v1166 = vld [vmem:[%s1146 + $0x4c] sm:$0xf]
        %v1167 = vld [vmem:[%s1146 + $0x50] sm:$0x1]
        %v1168 = vld [vmem:[%s1146 + $0x54] sm:$0xf]
        %v1169 = vld [vmem:[%s1146 + $0x58] sm:$0xf]
        %v1170 = vld [vmem:[%s1146 + $0x5c] sm:$0x1]
        %v1171 = vunpack.c.l.bf16 %v1147
        %v1172 = vunpack.c.l.bf16 %v1148
        %v1173 = vunpack.c.l.bf16 %v1149
        %v1174 = vunpack.c.l.bf16 %v1150
        %v1175 = vunpack.c.l.bf16 %v1151
        %v1176 = vunpack.c.l.bf16 %v1152
        %v1177 = vunpack.c.l.bf16 %v1153
        %v1178 = vunpack.c.l.bf16 %v1154
        %v1179 = vunpack.c.l.bf16 %v1155
        %v1180 = vunpack.c.l.bf16 %v1156
        %v1181 = vunpack.c.l.bf16 %v1157
        %v1182 = vunpack.c.l.bf16 %v1158
        %v1183 = vunpack.c.l.bf16 %v1159
        %v1184 = vunpack.c.l.bf16 %v1160
        %v1185 = vunpack.c.l.bf16 %v1161
        %v1186 = vunpack.c.l.bf16 %v1162
        %v1187 = vunpack.c.l.bf16 %v1163
        %v1188 = vunpack.c.l.bf16 %v1164
        %v1189 = vunpack.c.l.bf16 %v1165
        %v1190 = vunpack.c.l.bf16 %v1166
        %v1191 = vunpack.c.l.bf16 %v1167
        %v1192 = vunpack.c.l.bf16 %v1168
        %v1193 = vunpack.c.l.bf16 %v1169
        %v1194 = vunpack.c.l.bf16 %v1170
        %v1195 = vmul.f32 %v1171, %v336
        %v1196 = vmul.f32 %v1172, %v341
        %v1197 = vmul.f32 %v1174, %v346
        %v1198 = vmul.f32 %v1175, %v351
        %v1199 = vmul.f32 %v1177, %v356
        %v1200 = vmul.f32 %v1178, %v361
        %v1201 = vmul.f32 %v1180, %v366
        %v1202 = vmul.f32 %v1181, %v371
        %v1203 = vmul.f32 %v1183, %v376
        %v1204 = vmul.f32 %v1184, %v381
        %v1205 = vmul.f32 %v1186, %v386
        %v1206 = vmul.f32 %v1187, %v391
        %v1207 = vmul.f32 %v1189, %v396
        %v1208 = vmul.f32 %v1190, %v401
        %v1209 = vmul.f32 %v1192, %v406
        %v1210 = vmul.f32 %v1193, %v411
        %v1211 = vadd.f32 %v1130, %v1195
        %v1212 = vadd.f32 %v1131, %v1196
        %v1213 = vadd.f32 %v1132, %v1197
        %v1214 = vadd.f32 %v1133, %v1198
        %v1215 = vadd.f32 %v1134, %v1199
        %v1216 = vadd.f32 %v1135, %v1200
        %v1217 = vadd.f32 %v1136, %v1201
        %v1218 = vadd.f32 %v1137, %v1202
        %v1219 = vadd.f32 %v1138, %v1203
        %v1220 = vadd.f32 %v1139, %v1204
        %v1221 = vadd.f32 %v1140, %v1205
        %v1222 = vadd.f32 %v1141, %v1206
        %v1223 = vadd.f32 %v1142, %v1207
        %v1224 = vadd.f32 %v1143, %v1208
        %v1225 = vadd.f32 %v1144, %v1209
        %v1226 = vadd.f32 %v1145, %v1210
        %v1227 = vmax.f32 %v1171, 0.0
        %v1228 = vmax.f32 %v1172, 0.0
        %v1229 = vmax.f32 %v1174, 0.0
        %v1230 = vmax.f32 %v1175, 0.0
        %v1231 = vmax.f32 %v1177, 0.0
        %v1232 = vmax.f32 %v1178, 0.0
        %v1233 = vmax.f32 %v1180, 0.0
        %v1234 = vmax.f32 %v1181, 0.0
        %v1235 = vmax.f32 %v1183, 0.0
        %v1236 = vmax.f32 %v1184, 0.0
        %v1237 = vmax.f32 %v1186, 0.0
        %v1238 = vmax.f32 %v1187, 0.0
        %v1239 = vmax.f32 %v1189, 0.0
        %v1240 = vmax.f32 %v1190, 0.0
        %v1241 = vmax.f32 %v1192, 0.0
        %v1242 = vmax.f32 %v1193, 0.0
        %v1243 = vpack.c.bf16 %v1228, %v1227
        %v1244 = vpack.c.bf16 %v1230, %v1229
        %v1245 = vpack.c.bf16 %v1232, %v1231
        %v1246 = vpack.c.bf16 %v1234, %v1233
        %v1247 = vpack.c.bf16 %v1236, %v1235
        %v1248 = vpack.c.bf16 %v1238, %v1237
        %v1249 = vpack.c.bf16 %v1240, %v1239
        %v1250 = vpack.c.bf16 %v1242, %v1241
        %s1251 = scalar_lea.vmem %s2, 6
        %v1252 = vld [vmem:[%s1251] sm:$0x3]
        %v1254 = vsel %vm470, %v1243, 0
        %v1257 = vsel %vm470, %v1244, 0
        %v1260 = vsel %vm470, %v1245, 0
        %v1263 = vsel %vm470, %v1246, 0
        %v1266 = vsel %vm470, %v1247, 0
        %v1269 = vsel %vm470, %v1248, 0
        %v1272 = vsel %vm470, %v1249, 0
        %v1275 = vsel %vm470, %v1250, 0
        %v1278 = vsel %vm495, %v1252, 0
        %1280 = vmatprep.subr.bf16.mxu0 0
        %1281 = vmatpush1.bf16.msra.mxu0 0
        %1282 = vmatprep.subr.bf16.mxu0 0
        %1283 = vmatpush1.bf16.msra.mxu0 0
        %1284 = vmatprep.subr.bf16.mxu0 0
        %1285 = vmatpush1.bf16.msra.mxu0 0
        %1286 = vmatprep.subr.bf16.mxu0 0
        %1287 = vmatpush1.bf16.msra.mxu0 0
        %1288 = vmatprep.subr.bf16.mxu0 0
        %1289 = vmatpush1.bf16.msra.mxu0 0
        %1290 = vmatprep.subr.bf16.mxu0 0
        %1291 = vmatpush1.bf16.msra.mxu0 0
        %1292 = vmatprep.subr.bf16.mxu0 0
        %1293 = vmatpush1.bf16.msra.mxu0 0
        %1294 = vmatprep.subr.bf16.mxu0 0
        %1295 = vmatpush1.bf16.msra.mxu0 %v1278
        %1296 = vmatprep.subr.bf16.mxu0 0
        %1297 = vmatpush2.bf16.msra.mxu0 0
        %1298 = vmatprep.subr.bf16.mxu0 0
        %1299 = vmatpush2.bf16.msra.mxu0 0
        %1300 = vmatprep.subr.bf16.mxu0 0
        %1301 = vmatpush2.bf16.msra.mxu0 0
        %1302 = vmatprep.subr.bf16.mxu0 0
        %1303 = vmatpush2.bf16.msra.mxu0 0
        %1304 = vmatprep.subr.bf16.mxu0 0
        %1305 = vmatpush2.bf16.msra.mxu0 0
        %1306 = vmatprep.subr.bf16.mxu0 0
        %1307 = vmatpush2.bf16.msra.mxu0 0
        %1308 = vmatprep.subr.bf16.mxu0 0
        %1309 = vmatpush2.bf16.msra.mxu0 0
        %1310 = vmatprep.subr.bf16.mxu0 0
        %1311 = vmatpush2.bf16.msra.mxu0 0
        %1312 = vmatprep.mubr.bf16.mxu0 0
        %1313 = vmatmul.mubr.bf16.gmra.mxu0 %v1254
        %v1314 = vpop.f32.mrf.mxu0
        %v1315 = vadd.f32 0.0, %v1314
        %v1316 = vpop.f32.mrf.mxu0
        %v1317 = vpop.f32.mrf.mxu0
        %v1318 = vadd.f32 0.0, %v1317
        %v1319 = vpop.f32.mrf.mxu0
        %1320 = vmatprep.mubr.bf16.mxu0 0
        %1321 = vmatmul.mubr.bf16.gmra.mxu0 %v1257
        %v1322 = vpop.f32.mrf.mxu0
        %v1323 = vadd.f32 0.0, %v1322
        %v1324 = vpop.f32.mrf.mxu0
        %v1325 = vpop.f32.mrf.mxu0
        %v1326 = vadd.f32 0.0, %v1325
        %v1327 = vpop.f32.mrf.mxu0
        %1328 = vmatprep.mubr.bf16.mxu0 0
        %1329 = vmatmul.mubr.bf16.gmra.mxu0 %v1260
        %v1330 = vpop.f32.mrf.mxu0
        %v1331 = vadd.f32 0.0, %v1330
        %v1332 = vpop.f32.mrf.mxu0
        %v1333 = vpop.f32.mrf.mxu0
        %v1334 = vadd.f32 0.0, %v1333
        %v1335 = vpop.f32.mrf.mxu0
        %1336 = vmatprep.mubr.bf16.mxu0 0
        %1337 = vmatmul.mubr.bf16.gmra.mxu0 %v1263
        %v1338 = vpop.f32.mrf.mxu0
        %v1339 = vadd.f32 0.0, %v1338
        %v1340 = vpop.f32.mrf.mxu0
        %v1341 = vpop.f32.mrf.mxu0
        %v1342 = vadd.f32 0.0, %v1341
        %v1343 = vpop.f32.mrf.mxu0
        %1344 = vmatprep.mubr.bf16.mxu0 0
        %1345 = vmatmul.mubr.bf16.gmra.mxu0 %v1266
        %v1346 = vpop.f32.mrf.mxu0
        %v1347 = vadd.f32 0.0, %v1346
        %v1348 = vpop.f32.mrf.mxu0
        %v1349 = vpop.f32.mrf.mxu0
        %v1350 = vadd.f32 0.0, %v1349
        %v1351 = vpop.f32.mrf.mxu0
        %1352 = vmatprep.mubr.bf16.mxu0 0
        %1353 = vmatmul.mubr.bf16.gmra.mxu0 %v1269
        %v1354 = vpop.f32.mrf.mxu0
        %v1355 = vadd.f32 0.0, %v1354
        %v1356 = vpop.f32.mrf.mxu0
        %v1357 = vpop.f32.mrf.mxu0
        %v1358 = vadd.f32 0.0, %v1357
        %v1359 = vpop.f32.mrf.mxu0
        %1360 = vmatprep.mubr.bf16.mxu0 0
        %1361 = vmatmul.mubr.bf16.gmra.mxu0 %v1272
        %v1362 = vpop.f32.mrf.mxu0
        %v1363 = vadd.f32 0.0, %v1362
        %v1364 = vpop.f32.mrf.mxu0
        %v1365 = vpop.f32.mrf.mxu0
        %v1366 = vadd.f32 0.0, %v1365
        %v1367 = vpop.f32.mrf.mxu0
        %1368 = vmatprep.mubr.bf16.mxu0 0
        %1369 = vmatmul.mubr.bf16.gmra.mxu0 %v1275
        %v1370 = vpop.f32.mrf.mxu0
        %v1371 = vadd.f32 0.0, %v1370
        %v1372 = vpop.f32.mrf.mxu0
        %v1373 = vpop.f32.mrf.mxu0
        %v1374 = vadd.f32 0.0, %v1373
        %v1375 = vpop.f32.mrf.mxu0
        %1376 = vdwg.mxu0
        %v1377 = vadd.f32 %v1211, %v1315
        %v1378 = vadd.f32 %v1212, %v1318
        %v1379 = vadd.f32 %v1213, %v1323
        %v1380 = vadd.f32 %v1214, %v1326
        %v1381 = vadd.f32 %v1215, %v1331
        %v1382 = vadd.f32 %v1216, %v1334
        %v1383 = vadd.f32 %v1217, %v1339
        %v1384 = vadd.f32 %v1218, %v1342
        %v1385 = vadd.f32 %v1219, %v1347
        %v1386 = vadd.f32 %v1220, %v1350
        %v1387 = vadd.f32 %v1221, %v1355
        %v1388 = vadd.f32 %v1222, %v1358
        %v1389 = vadd.f32 %v1223, %v1363
        %v1390 = vadd.f32 %v1224, %v1366
        %v1391 = vadd.f32 %v1225, %v1371
        %v1392 = vadd.f32 %v1226, %v1374
        %v1417 = vrot.slane %v1171, 1
        %v1418 = vrot.slane %v1172, 1
        %v1419 = vsel %vm636, %v1417, %v1418
        %v1420 = vrot.slane %v1173, 1
        %v1421 = vsel %vm636, %v1418, %v1420
        %v1422 = vrot.slane %v1174, 1
        %v1423 = vrot.slane %v1175, 1
        %v1424 = vsel %vm636, %v1422, %v1423
        %v1425 = vrot.slane %v1176, 1
        %v1426 = vsel %vm636, %v1423, %v1425
        %v1427 = vrot.slane %v1177, 1
        %v1428 = vrot.slane %v1178, 1
        %v1429 = vsel %vm636, %v1427, %v1428
        %v1430 = vrot.slane %v1179, 1
        %v1431 = vsel %vm636, %v1428, %v1430
        %v1432 = vrot.slane %v1180, 1
        %v1433 = vrot.slane %v1181, 1
        %v1434 = vsel %vm636, %v1432, %v1433
        %v1435 = vrot.slane %v1182, 1
        %v1436 = vsel %vm636, %v1433, %v1435
        %v1437 = vrot.slane %v1183, 1
        %v1438 = vrot.slane %v1184, 1
        %v1439 = vsel %vm636, %v1437, %v1438
        %v1440 = vrot.slane %v1185, 1
        %v1441 = vsel %vm636, %v1438, %v1440
        %v1442 = vrot.slane %v1186, 1
        %v1443 = vrot.slane %v1187, 1
        %v1444 = vsel %vm636, %v1442, %v1443
        %v1445 = vrot.slane %v1188, 1
        %v1446 = vsel %vm636, %v1443, %v1445
        %v1447 = vrot.slane %v1189, 1
        %v1448 = vrot.slane %v1190, 1
        %v1449 = vsel %vm636, %v1447, %v1448
        %v1450 = vrot.slane %v1191, 1
        %v1451 = vsel %vm636, %v1448, %v1450
        %v1452 = vrot.slane %v1192, 1
        %v1453 = vrot.slane %v1193, 1
        %v1454 = vsel %vm636, %v1452, %v1453
        %v1455 = vrot.slane %v1194, 1
        %v1456 = vsel %vm636, %v1453, %v1455
        %v1473 = vmul.f32 %v1419, %v336
        %v1474 = vmul.f32 %v1421, %v341
        %v1475 = vmul.f32 %v1424, %v346
        %v1476 = vmul.f32 %v1426, %v351
        %v1477 = vmul.f32 %v1429, %v356
        %v1478 = vmul.f32 %v1431, %v361
        %v1479 = vmul.f32 %v1434, %v366
        %v1480 = vmul.f32 %v1436, %v371
        %v1481 = vmul.f32 %v1439, %v376
        %v1482 = vmul.f32 %v1441, %v381
        %v1483 = vmul.f32 %v1444, %v386
        %v1484 = vmul.f32 %v1446, %v391
        %v1485 = vmul.f32 %v1449, %v396
        %v1486 = vmul.f32 %v1451, %v401
        %v1487 = vmul.f32 %v1454, %v406
        %v1488 = vmul.f32 %v1456, %v411
        %v1489 = vadd.f32 %v1377, %v1473
        %v1490 = vadd.f32 %v1378, %v1474
        %v1491 = vadd.f32 %v1379, %v1475
        %v1492 = vadd.f32 %v1380, %v1476
        %v1493 = vadd.f32 %v1381, %v1477
        %v1494 = vadd.f32 %v1382, %v1478
        %v1495 = vadd.f32 %v1383, %v1479
        %v1496 = vadd.f32 %v1384, %v1480
        %v1497 = vadd.f32 %v1385, %v1481
        %v1498 = vadd.f32 %v1386, %v1482
        %v1499 = vadd.f32 %v1387, %v1483
        %v1500 = vadd.f32 %v1388, %v1484
        %v1501 = vadd.f32 %v1389, %v1485
        %v1502 = vadd.f32 %v1390, %v1486
        %v1503 = vadd.f32 %v1391, %v1487
        %v1504 = vadd.f32 %v1392, %v1488
        %v1505 = vstv %s260
        %v1506 = vmul.f32 %v1505, %v1419
        %v1507 = vmul.f32 %v1505, %v1421
        %v1508 = vmul.f32 %v1505, %v1424
        %v1509 = vmul.f32 %v1505, %v1426
        %v1510 = vmul.f32 %v1505, %v1429
        %v1511 = vmul.f32 %v1505, %v1431
        %v1512 = vmul.f32 %v1505, %v1434
        %v1513 = vmul.f32 %v1505, %v1436
        %v1514 = vmul.f32 %v1505, %v1439
        %v1515 = vmul.f32 %v1505, %v1441
        %v1516 = vmul.f32 %v1505, %v1444
        %v1517 = vmul.f32 %v1505, %v1446
        %v1518 = vmul.f32 %v1505, %v1449
        %v1519 = vmul.f32 %v1505, %v1451
        %v1520 = vmul.f32 %v1505, %v1454
        %v1521 = vmul.f32 %v1505, %v1456
        %v1522 = vadd.f32 %v1489, %v1506
        %v1523 = vadd.f32 %v1490, %v1507
        %v1524 = vadd.f32 %v1491, %v1508
        %v1525 = vadd.f32 %v1492, %v1509
        %v1526 = vadd.f32 %v1493, %v1510
        %v1527 = vadd.f32 %v1494, %v1511
        %v1528 = vadd.f32 %v1495, %v1512
        %v1529 = vadd.f32 %v1496, %v1513
        %v1530 = vadd.f32 %v1497, %v1514
        %v1531 = vadd.f32 %v1498, %v1515
        %v1532 = vadd.f32 %v1499, %v1516
        %v1533 = vadd.f32 %v1500, %v1517
        %v1534 = vadd.f32 %v1501, %v1518
        %v1535 = vadd.f32 %v1502, %v1519
        %v1536 = vadd.f32 %v1503, %v1520
        %v1537 = vadd.f32 %v1504, %v1521
        %v1538 = vmax.f32 %v1419, 0.0
        %v1539 = vmax.f32 %v1421, 0.0
        %v1540 = vmax.f32 %v1424, 0.0
        %v1541 = vmax.f32 %v1426, 0.0
        %v1542 = vmax.f32 %v1429, 0.0
        %v1543 = vmax.f32 %v1431, 0.0
        %v1544 = vmax.f32 %v1434, 0.0
        %v1545 = vmax.f32 %v1436, 0.0
        %v1546 = vmax.f32 %v1439, 0.0
        %v1547 = vmax.f32 %v1441, 0.0
        %v1548 = vmax.f32 %v1444, 0.0
        %v1549 = vmax.f32 %v1446, 0.0
        %v1550 = vmax.f32 %v1449, 0.0
        %v1551 = vmax.f32 %v1451, 0.0
        %v1552 = vmax.f32 %v1454, 0.0
        %v1553 = vmax.f32 %v1456, 0.0
        %v1554 = vpack.c.bf16 %v1539, %v1538
        %v1555 = vpack.c.bf16 %v1541, %v1540
        %v1556 = vpack.c.bf16 %v1543, %v1542
        %v1557 = vpack.c.bf16 %v1545, %v1544
        %v1558 = vpack.c.bf16 %v1547, %v1546
        %v1559 = vpack.c.bf16 %v1549, %v1548
        %v1560 = vpack.c.bf16 %v1551, %v1550
        %v1561 = vpack.c.bf16 %v1553, %v1552
        %s1562 = scalar_lea.vmem %s2, 8
        %v1563 = vld [vmem:[%s1562] sm:$0x3]
        %v1565 = vsel %vm470, %v1554, 0
        %v1568 = vsel %vm470, %v1555, 0
        %v1571 = vsel %vm470, %v1556, 0
        %v1574 = vsel %vm470, %v1557, 0
        %v1577 = vsel %vm470, %v1558, 0
        %v1580 = vsel %vm470, %v1559, 0
        %v1583 = vsel %vm470, %v1560, 0
        %v1586 = vsel %vm470, %v1561, 0
        %v1589 = vsel %vm495, %v1563, 0
        %1591 = vmatprep.subr.bf16.mxu0 0
        %1592 = vmatpush1.bf16.msra.mxu0 0
        %1593 = vmatprep.subr.bf16.mxu0 0
        %1594 = vmatpush1.bf16.msra.mxu0 0
        %1595 = vmatprep.subr.bf16.mxu0 0
        %1596 = vmatpush1.bf16.msra.mxu0 0
        %1597 = vmatprep.subr.bf16.mxu0 0
        %1598 = vmatpush1.bf16.msra.mxu0 0
        %1599 = vmatprep.subr.bf16.mxu0 0
        %1600 = vmatpush1.bf16.msra.mxu0 0
        %1601 = vmatprep.subr.bf16.mxu0 0
        %1602 = vmatpush1.bf16.msra.mxu0 0
        %1603 = vmatprep.subr.bf16.mxu0 0
        %1604 = vmatpush1.bf16.msra.mxu0 0
        %1605 = vmatprep.subr.bf16.mxu0 0
        %1606 = vmatpush1.bf16.msra.mxu0 %v1589
        %1607 = vmatprep.subr.bf16.mxu0 0
        %1608 = vmatpush2.bf16.msra.mxu0 0
        %1609 = vmatprep.subr.bf16.mxu0 0
        %1610 = vmatpush2.bf16.msra.mxu0 0
        %1611 = vmatprep.subr.bf16.mxu0 0
        %1612 = vmatpush2.bf16.msra.mxu0 0
        %1613 = vmatprep.subr.bf16.mxu0 0
        %1614 = vmatpush2.bf16.msra.mxu0 0
        %1615 = vmatprep.subr.bf16.mxu0 0
        %1616 = vmatpush2.bf16.msra.mxu0 0
        %1617 = vmatprep.subr.bf16.mxu0 0
        %1618 = vmatpush2.bf16.msra.mxu0 0
        %1619 = vmatprep.subr.bf16.mxu0 0
        %1620 = vmatpush2.bf16.msra.mxu0 0
        %1621 = vmatprep.subr.bf16.mxu0 0
        %1622 = vmatpush2.bf16.msra.mxu0 0
        %1623 = vmatprep.mubr.bf16.mxu0 0
        %1624 = vmatmul.mubr.bf16.gmra.mxu0 %v1565
        %v1625 = vpop.f32.mrf.mxu0
        %v1626 = vadd.f32 0.0, %v1625
        %v1627 = vpop.f32.mrf.mxu0
        %v1628 = vpop.f32.mrf.mxu0
        %v1629 = vadd.f32 0.0, %v1628
        %v1630 = vpop.f32.mrf.mxu0
        %1631 = vmatprep.mubr.bf16.mxu0 0
        %1632 = vmatmul.mubr.bf16.gmra.mxu0 %v1568
        %v1633 = vpop.f32.mrf.mxu0
        %v1634 = vadd.f32 0.0, %v1633
        %v1635 = vpop.f32.mrf.mxu0
        %v1636 = vpop.f32.mrf.mxu0
        %v1637 = vadd.f32 0.0, %v1636
        %v1638 = vpop.f32.mrf.mxu0
        %1639 = vmatprep.mubr.bf16.mxu0 0
        %1640 = vmatmul.mubr.bf16.gmra.mxu0 %v1571
        %v1641 = vpop.f32.mrf.mxu0
        %v1642 = vadd.f32 0.0, %v1641
        %v1643 = vpop.f32.mrf.mxu0
        %v1644 = vpop.f32.mrf.mxu0
        %v1645 = vadd.f32 0.0, %v1644
        %v1646 = vpop.f32.mrf.mxu0
        %1647 = vmatprep.mubr.bf16.mxu0 0
        %1648 = vmatmul.mubr.bf16.gmra.mxu0 %v1574
        %v1649 = vpop.f32.mrf.mxu0
        %v1650 = vadd.f32 0.0, %v1649
        %v1651 = vpop.f32.mrf.mxu0
        %v1652 = vpop.f32.mrf.mxu0
        %v1653 = vadd.f32 0.0, %v1652
        %v1654 = vpop.f32.mrf.mxu0
        %1655 = vmatprep.mubr.bf16.mxu0 0
        %1656 = vmatmul.mubr.bf16.gmra.mxu0 %v1577
        %v1657 = vpop.f32.mrf.mxu0
        %v1658 = vadd.f32 0.0, %v1657
        %v1659 = vpop.f32.mrf.mxu0
        %v1660 = vpop.f32.mrf.mxu0
        %v1661 = vadd.f32 0.0, %v1660
        %v1662 = vpop.f32.mrf.mxu0
        %1663 = vmatprep.mubr.bf16.mxu0 0
        %1664 = vmatmul.mubr.bf16.gmra.mxu0 %v1580
        %v1665 = vpop.f32.mrf.mxu0
        %v1666 = vadd.f32 0.0, %v1665
        %v1667 = vpop.f32.mrf.mxu0
        %v1668 = vpop.f32.mrf.mxu0
        %v1669 = vadd.f32 0.0, %v1668
        %v1670 = vpop.f32.mrf.mxu0
        %1671 = vmatprep.mubr.bf16.mxu0 0
        %1672 = vmatmul.mubr.bf16.gmra.mxu0 %v1583
        %v1673 = vpop.f32.mrf.mxu0
        %v1674 = vadd.f32 0.0, %v1673
        %v1675 = vpop.f32.mrf.mxu0
        %v1676 = vpop.f32.mrf.mxu0
        %v1677 = vadd.f32 0.0, %v1676
        %v1678 = vpop.f32.mrf.mxu0
        %1679 = vmatprep.mubr.bf16.mxu0 0
        %1680 = vmatmul.mubr.bf16.gmra.mxu0 %v1586
        %v1681 = vpop.f32.mrf.mxu0
        %v1682 = vadd.f32 0.0, %v1681
        %v1683 = vpop.f32.mrf.mxu0
        %v1684 = vpop.f32.mrf.mxu0
        %v1685 = vadd.f32 0.0, %v1684
        %v1686 = vpop.f32.mrf.mxu0
        %1687 = vdwg.mxu0
        %v1688 = vadd.f32 %v1522, %v1626
        %v1689 = vadd.f32 %v1523, %v1629
        %v1690 = vadd.f32 %v1524, %v1634
        %v1691 = vadd.f32 %v1525, %v1637
        %v1692 = vadd.f32 %v1526, %v1642
        %v1693 = vadd.f32 %v1527, %v1645
        %v1694 = vadd.f32 %v1528, %v1650
        %v1695 = vadd.f32 %v1529, %v1653
        %v1696 = vadd.f32 %v1530, %v1658
        %v1697 = vadd.f32 %v1531, %v1661
        %v1698 = vadd.f32 %v1532, %v1666
        %v1699 = vadd.f32 %v1533, %v1669
        %v1700 = vadd.f32 %v1534, %v1674
        %v1701 = vadd.f32 %v1535, %v1677
        %v1702 = vadd.f32 %v1536, %v1682
        %v1703 = vadd.f32 %v1537, %v1685
        %v1704 = vrot.slane %v1171, 2
        %v1705 = vrot.slane %v1172, 2
        %v1706 = vsel %vm891, %v1704, %v1705
        %v1707 = vrot.slane %v1173, 2
        %v1708 = vsel %vm891, %v1705, %v1707
        %v1709 = vrot.slane %v1174, 2
        %v1710 = vrot.slane %v1175, 2
        %v1711 = vsel %vm891, %v1709, %v1710
        %v1712 = vrot.slane %v1176, 2
        %v1713 = vsel %vm891, %v1710, %v1712
        %v1714 = vrot.slane %v1177, 2
        %v1715 = vrot.slane %v1178, 2
        %v1716 = vsel %vm891, %v1714, %v1715
        %v1717 = vrot.slane %v1179, 2
        %v1718 = vsel %vm891, %v1715, %v1717
        %v1719 = vrot.slane %v1180, 2
        %v1720 = vrot.slane %v1181, 2
        %v1721 = vsel %vm891, %v1719, %v1720
        %v1722 = vrot.slane %v1182, 2
        %v1723 = vsel %vm891, %v1720, %v1722
        %v1724 = vrot.slane %v1183, 2
        %v1725 = vrot.slane %v1184, 2
        %v1726 = vsel %vm891, %v1724, %v1725
        %v1727 = vrot.slane %v1185, 2
        %v1728 = vsel %vm891, %v1725, %v1727
        %v1729 = vrot.slane %v1186, 2
        %v1730 = vrot.slane %v1187, 2
        %v1731 = vsel %vm891, %v1729, %v1730
        %v1732 = vrot.slane %v1188, 2
        %v1733 = vsel %vm891, %v1730, %v1732
        %v1734 = vrot.slane %v1189, 2
        %v1735 = vrot.slane %v1190, 2
        %v1736 = vsel %vm891, %v1734, %v1735
        %v1737 = vrot.slane %v1191, 2
        %v1738 = vsel %vm891, %v1735, %v1737
        %v1739 = vrot.slane %v1192, 2
        %v1740 = vrot.slane %v1193, 2
        %v1741 = vsel %vm891, %v1739, %v1740
        %v1742 = vrot.slane %v1194, 2
        %v1743 = vsel %vm891, %v1740, %v1742
        %v1760 = vmul.f32 %v1706, %v336
        %v1761 = vmul.f32 %v1708, %v341
        %v1762 = vmul.f32 %v1711, %v346
        %v1763 = vmul.f32 %v1713, %v351
        %v1764 = vmul.f32 %v1716, %v356
        %v1765 = vmul.f32 %v1718, %v361
        %v1766 = vmul.f32 %v1721, %v366
        %v1767 = vmul.f32 %v1723, %v371
        %v1768 = vmul.f32 %v1726, %v376
        %v1769 = vmul.f32 %v1728, %v381
        %v1770 = vmul.f32 %v1731, %v386
        %v1771 = vmul.f32 %v1733, %v391
        %v1772 = vmul.f32 %v1736, %v396
        %v1773 = vmul.f32 %v1738, %v401
        %v1774 = vmul.f32 %v1741, %v406
        %v1775 = vmul.f32 %v1743, %v411
        %v1776 = vadd.f32 %v1688, %v1760
        %v1777 = vadd.f32 %v1689, %v1761
        %v1778 = vadd.f32 %v1690, %v1762
        %v1779 = vadd.f32 %v1691, %v1763
        %v1780 = vadd.f32 %v1692, %v1764
        %v1781 = vadd.f32 %v1693, %v1765
        %v1782 = vadd.f32 %v1694, %v1766
        %v1783 = vadd.f32 %v1695, %v1767
        %v1784 = vadd.f32 %v1696, %v1768
        %v1785 = vadd.f32 %v1697, %v1769
        %v1786 = vadd.f32 %v1698, %v1770
        %v1787 = vadd.f32 %v1699, %v1771
        %v1788 = vadd.f32 %v1700, %v1772
        %v1789 = vadd.f32 %v1701, %v1773
        %v1790 = vadd.f32 %v1702, %v1774
        %v1791 = vadd.f32 %v1703, %v1775
        %v1792 = vmax.f32 %v1706, 0.0
        %v1793 = vmax.f32 %v1708, 0.0
        %v1794 = vmax.f32 %v1711, 0.0
        %v1795 = vmax.f32 %v1713, 0.0
        %v1796 = vmax.f32 %v1716, 0.0
        %v1797 = vmax.f32 %v1718, 0.0
        %v1798 = vmax.f32 %v1721, 0.0
        %v1799 = vmax.f32 %v1723, 0.0
        %v1800 = vmax.f32 %v1726, 0.0
        %v1801 = vmax.f32 %v1728, 0.0
        %v1802 = vmax.f32 %v1731, 0.0
        %v1803 = vmax.f32 %v1733, 0.0
        %v1804 = vmax.f32 %v1736, 0.0
        %v1805 = vmax.f32 %v1738, 0.0
        %v1806 = vmax.f32 %v1741, 0.0
        %v1807 = vmax.f32 %v1743, 0.0
        %v1808 = vpack.c.bf16 %v1793, %v1792
        %v1809 = vpack.c.bf16 %v1795, %v1794
        %v1810 = vpack.c.bf16 %v1797, %v1796
        %v1811 = vpack.c.bf16 %v1799, %v1798
        %v1812 = vpack.c.bf16 %v1801, %v1800
        %v1813 = vpack.c.bf16 %v1803, %v1802
        %v1814 = vpack.c.bf16 %v1805, %v1804
        %v1815 = vpack.c.bf16 %v1807, %v1806
        %s1816 = scalar_lea.vmem %s2, 10
        %v1817 = vld [vmem:[%s1816] sm:$0x3]
        %v1819 = vsel %vm470, %v1808, 0
        %v1822 = vsel %vm470, %v1809, 0
        %v1825 = vsel %vm470, %v1810, 0
        %v1828 = vsel %vm470, %v1811, 0
        %v1831 = vsel %vm470, %v1812, 0
        %v1834 = vsel %vm470, %v1813, 0
        %v1837 = vsel %vm470, %v1814, 0
        %v1840 = vsel %vm470, %v1815, 0
        %v1843 = vsel %vm495, %v1817, 0
        %1845 = vmatprep.subr.bf16.mxu0 0
        %1846 = vmatpush1.bf16.msra.mxu0 0
        %1847 = vmatprep.subr.bf16.mxu0 0
        %1848 = vmatpush1.bf16.msra.mxu0 0
        %1849 = vmatprep.subr.bf16.mxu0 0
        %1850 = vmatpush1.bf16.msra.mxu0 0
        %1851 = vmatprep.subr.bf16.mxu0 0
        %1852 = vmatpush1.bf16.msra.mxu0 0
        %1853 = vmatprep.subr.bf16.mxu0 0
        %1854 = vmatpush1.bf16.msra.mxu0 0
        %1855 = vmatprep.subr.bf16.mxu0 0
        %1856 = vmatpush1.bf16.msra.mxu0 0
        %1857 = vmatprep.subr.bf16.mxu0 0
        %1858 = vmatpush1.bf16.msra.mxu0 0
        %1859 = vmatprep.subr.bf16.mxu0 0
        %1860 = vmatpush1.bf16.msra.mxu0 %v1843
        %1861 = vmatprep.subr.bf16.mxu0 0
        %1862 = vmatpush2.bf16.msra.mxu0 0
        %1863 = vmatprep.subr.bf16.mxu0 0
        %1864 = vmatpush2.bf16.msra.mxu0 0
        %1865 = vmatprep.subr.bf16.mxu0 0
        %1866 = vmatpush2.bf16.msra.mxu0 0
        %1867 = vmatprep.subr.bf16.mxu0 0
        %1868 = vmatpush2.bf16.msra.mxu0 0
        %1869 = vmatprep.subr.bf16.mxu0 0
        %1870 = vmatpush2.bf16.msra.mxu0 0
        %1871 = vmatprep.subr.bf16.mxu0 0
        %1872 = vmatpush2.bf16.msra.mxu0 0
        %1873 = vmatprep.subr.bf16.mxu0 0
        %1874 = vmatpush2.bf16.msra.mxu0 0
        %1875 = vmatprep.subr.bf16.mxu0 0
        %1876 = vmatpush2.bf16.msra.mxu0 0
        %1877 = vmatprep.mubr.bf16.mxu0 0
        %1878 = vmatmul.mubr.bf16.gmra.mxu0 %v1819
        %v1879 = vpop.f32.mrf.mxu0
        %v1880 = vadd.f32 0.0, %v1879
        %v1881 = vpop.f32.mrf.mxu0
        %v1882 = vpop.f32.mrf.mxu0
        %v1883 = vadd.f32 0.0, %v1882
        %v1884 = vpop.f32.mrf.mxu0
        %1885 = vmatprep.mubr.bf16.mxu0 0
        %1886 = vmatmul.mubr.bf16.gmra.mxu0 %v1822
        %v1887 = vpop.f32.mrf.mxu0
        %v1888 = vadd.f32 0.0, %v1887
        %v1889 = vpop.f32.mrf.mxu0
        %v1890 = vpop.f32.mrf.mxu0
        %v1891 = vadd.f32 0.0, %v1890
        %v1892 = vpop.f32.mrf.mxu0
        %1893 = vmatprep.mubr.bf16.mxu0 0
        %1894 = vmatmul.mubr.bf16.gmra.mxu0 %v1825
        %v1895 = vpop.f32.mrf.mxu0
        %v1896 = vadd.f32 0.0, %v1895
        %v1897 = vpop.f32.mrf.mxu0
        %v1898 = vpop.f32.mrf.mxu0
        %v1899 = vadd.f32 0.0, %v1898
        %v1900 = vpop.f32.mrf.mxu0
        %1901 = vmatprep.mubr.bf16.mxu0 0
        %1902 = vmatmul.mubr.bf16.gmra.mxu0 %v1828
        %v1903 = vpop.f32.mrf.mxu0
        %v1904 = vadd.f32 0.0, %v1903
        %v1905 = vpop.f32.mrf.mxu0
        %v1906 = vpop.f32.mrf.mxu0
        %v1907 = vadd.f32 0.0, %v1906
        %v1908 = vpop.f32.mrf.mxu0
        %1909 = vmatprep.mubr.bf16.mxu0 0
        %1910 = vmatmul.mubr.bf16.gmra.mxu0 %v1831
        %v1911 = vpop.f32.mrf.mxu0
        %v1912 = vadd.f32 0.0, %v1911
        %v1913 = vpop.f32.mrf.mxu0
        %v1914 = vpop.f32.mrf.mxu0
        %v1915 = vadd.f32 0.0, %v1914
        %v1916 = vpop.f32.mrf.mxu0
        %1917 = vmatprep.mubr.bf16.mxu0 0
        %1918 = vmatmul.mubr.bf16.gmra.mxu0 %v1834
        %v1919 = vpop.f32.mrf.mxu0
        %v1920 = vadd.f32 0.0, %v1919
        %v1921 = vpop.f32.mrf.mxu0
        %v1922 = vpop.f32.mrf.mxu0
        %v1923 = vadd.f32 0.0, %v1922
        %v1924 = vpop.f32.mrf.mxu0
        %1925 = vmatprep.mubr.bf16.mxu0 0
        %1926 = vmatmul.mubr.bf16.gmra.mxu0 %v1837
        %v1927 = vpop.f32.mrf.mxu0
        %v1928 = vadd.f32 0.0, %v1927
        %v1929 = vpop.f32.mrf.mxu0
        %v1930 = vpop.f32.mrf.mxu0
        %v1931 = vadd.f32 0.0, %v1930
        %v1932 = vpop.f32.mrf.mxu0
        %1933 = vmatprep.mubr.bf16.mxu0 0
        %1934 = vmatmul.mubr.bf16.gmra.mxu0 %v1840
        %v1935 = vpop.f32.mrf.mxu0
        %v1936 = vadd.f32 0.0, %v1935
        %v1937 = vpop.f32.mrf.mxu0
        %v1938 = vpop.f32.mrf.mxu0
        %v1939 = vadd.f32 0.0, %v1938
        %v1940 = vpop.f32.mrf.mxu0
        %1941 = vdwg.mxu0
        %v1942 = vadd.f32 %v1776, %v1880
        %v1943 = vadd.f32 %v1777, %v1883
        %v1944 = vadd.f32 %v1778, %v1888
        %v1945 = vadd.f32 %v1779, %v1891
        %v1946 = vadd.f32 %v1780, %v1896
        %v1947 = vadd.f32 %v1781, %v1899
        %v1948 = vadd.f32 %v1782, %v1904
        %v1949 = vadd.f32 %v1783, %v1907
        %v1950 = vadd.f32 %v1784, %v1912
        %v1951 = vadd.f32 %v1785, %v1915
        %v1952 = vadd.f32 %v1786, %v1920
        %v1953 = vadd.f32 %v1787, %v1923
        %v1954 = vadd.f32 %v1788, %v1928
        %v1955 = vadd.f32 %v1789, %v1931
        %v1956 = vadd.f32 %v1790, %v1936
        %v1957 = vadd.f32 %v1791, %v1939
        %s1958 = scalar_lea.vmem %s248, 24
        %v1959 = vld [vmem:[%s1958] sm:$0xf]
        %v1960 = vld [vmem:[%s1958 + $0x4] sm:$0xf]
        %v1961 = vld [vmem:[%s1958 + $0x8] sm:$0x1]
        %v1962 = vld [vmem:[%s1958 + $0xc] sm:$0xf]
        %v1963 = vld [vmem:[%s1958 + $0x10] sm:$0xf]
        %v1964 = vld [vmem:[%s1958 + $0x14] sm:$0x1]
        %v1965 = vld [vmem:[%s1958 + $0x18] sm:$0xf]
        %v1966 = vld [vmem:[%s1958 + $0x1c] sm:$0xf]
        %v1967 = vld [vmem:[%s1958 + $0x20] sm:$0x1]
        %v1968 = vld [vmem:[%s1958 + $0x24] sm:$0xf]
        %v1969 = vld [vmem:[%s1958 + $0x28] sm:$0xf]
        %v1970 = vld [vmem:[%s1958 + $0x2c] sm:$0x1]
        %v1971 = vld [vmem:[%s1958 + $0x30] sm:$0xf]
        %v1972 = vld [vmem:[%s1958 + $0x34] sm:$0xf]
        %v1973 = vld [vmem:[%s1958 + $0x38] sm:$0x1]
        %v1974 = vld [vmem:[%s1958 + $0x3c] sm:$0xf]
        %v1975 = vld [vmem:[%s1958 + $0x40] sm:$0xf]
        %v1976 = vld [vmem:[%s1958 + $0x44] sm:$0x1]
        %v1977 = vld [vmem:[%s1958 + $0x48] sm:$0xf]
        %v1978 = vld [vmem:[%s1958 + $0x4c] sm:$0xf]
        %v1979 = vld [vmem:[%s1958 + $0x50] sm:$0x1]
        %v1980 = vld [vmem:[%s1958 + $0x54] sm:$0xf]
        %v1981 = vld [vmem:[%s1958 + $0x58] sm:$0xf]
        %v1982 = vld [vmem:[%s1958 + $0x5c] sm:$0x1]
        %v1983 = vunpack.c.l.bf16 %v1959
        %v1984 = vunpack.c.l.bf16 %v1960
        %v1985 = vunpack.c.l.bf16 %v1961
        %v1986 = vunpack.c.l.bf16 %v1962
        %v1987 = vunpack.c.l.bf16 %v1963
        %v1988 = vunpack.c.l.bf16 %v1964
        %v1989 = vunpack.c.l.bf16 %v1965
        %v1990 = vunpack.c.l.bf16 %v1966
        %v1991 = vunpack.c.l.bf16 %v1967
        %v1992 = vunpack.c.l.bf16 %v1968
        %v1993 = vunpack.c.l.bf16 %v1969
        %v1994 = vunpack.c.l.bf16 %v1970
        %v1995 = vunpack.c.l.bf16 %v1971
        %v1996 = vunpack.c.l.bf16 %v1972
        %v1997 = vunpack.c.l.bf16 %v1973
        %v1998 = vunpack.c.l.bf16 %v1974
        %v1999 = vunpack.c.l.bf16 %v1975
        %v2000 = vunpack.c.l.bf16 %v1976
        %v2001 = vunpack.c.l.bf16 %v1977
        %v2002 = vunpack.c.l.bf16 %v1978
        %v2003 = vunpack.c.l.bf16 %v1979
        %v2004 = vunpack.c.l.bf16 %v1980
        %v2005 = vunpack.c.l.bf16 %v1981
        %v2006 = vunpack.c.l.bf16 %v1982
        %v2007 = vmul.f32 %v1983, %v336
        %v2008 = vmul.f32 %v1984, %v341
        %v2009 = vmul.f32 %v1986, %v346
        %v2010 = vmul.f32 %v1987, %v351
        %v2011 = vmul.f32 %v1989, %v356
        %v2012 = vmul.f32 %v1990, %v361
        %v2013 = vmul.f32 %v1992, %v366
        %v2014 = vmul.f32 %v1993, %v371
        %v2015 = vmul.f32 %v1995, %v376
        %v2016 = vmul.f32 %v1996, %v381
        %v2017 = vmul.f32 %v1998, %v386
        %v2018 = vmul.f32 %v1999, %v391
        %v2019 = vmul.f32 %v2001, %v396
        %v2020 = vmul.f32 %v2002, %v401
        %v2021 = vmul.f32 %v2004, %v406
        %v2022 = vmul.f32 %v2005, %v411
        %v2023 = vadd.f32 %v1942, %v2007
        %v2024 = vadd.f32 %v1943, %v2008
        %v2025 = vadd.f32 %v1944, %v2009
        %v2026 = vadd.f32 %v1945, %v2010
        %v2027 = vadd.f32 %v1946, %v2011
        %v2028 = vadd.f32 %v1947, %v2012
        %v2029 = vadd.f32 %v1948, %v2013
        %v2030 = vadd.f32 %v1949, %v2014
        %v2031 = vadd.f32 %v1950, %v2015
        %v2032 = vadd.f32 %v1951, %v2016
        %v2033 = vadd.f32 %v1952, %v2017
        %v2034 = vadd.f32 %v1953, %v2018
        %v2035 = vadd.f32 %v1954, %v2019
        %v2036 = vadd.f32 %v1955, %v2020
        %v2037 = vadd.f32 %v1956, %v2021
        %v2038 = vadd.f32 %v1957, %v2022
        %v2039 = vmax.f32 %v1983, 0.0
        %v2040 = vmax.f32 %v1984, 0.0
        %v2041 = vmax.f32 %v1986, 0.0
        %v2042 = vmax.f32 %v1987, 0.0
        %v2043 = vmax.f32 %v1989, 0.0
        %v2044 = vmax.f32 %v1990, 0.0
        %v2045 = vmax.f32 %v1992, 0.0
        %v2046 = vmax.f32 %v1993, 0.0
        %v2047 = vmax.f32 %v1995, 0.0
        %v2048 = vmax.f32 %v1996, 0.0
        %v2049 = vmax.f32 %v1998, 0.0
        %v2050 = vmax.f32 %v1999, 0.0
        %v2051 = vmax.f32 %v2001, 0.0
        %v2052 = vmax.f32 %v2002, 0.0
        %v2053 = vmax.f32 %v2004, 0.0
        %v2054 = vmax.f32 %v2005, 0.0
        %v2055 = vpack.c.bf16 %v2040, %v2039
        %v2056 = vpack.c.bf16 %v2042, %v2041
        %v2057 = vpack.c.bf16 %v2044, %v2043
        %v2058 = vpack.c.bf16 %v2046, %v2045
        %v2059 = vpack.c.bf16 %v2048, %v2047
        %v2060 = vpack.c.bf16 %v2050, %v2049
        %v2061 = vpack.c.bf16 %v2052, %v2051
        %v2062 = vpack.c.bf16 %v2054, %v2053
        %s2063 = scalar_lea.vmem %s2, 12
        %v2064 = vld [vmem:[%s2063] sm:$0x3]
        %v2066 = vsel %vm470, %v2055, 0
        %v2069 = vsel %vm470, %v2056, 0
        %v2072 = vsel %vm470, %v2057, 0
        %v2075 = vsel %vm470, %v2058, 0
        %v2078 = vsel %vm470, %v2059, 0
        %v2081 = vsel %vm470, %v2060, 0
        %v2084 = vsel %vm470, %v2061, 0
        %v2087 = vsel %vm470, %v2062, 0
        %v2090 = vsel %vm495, %v2064, 0
        %2092 = vmatprep.subr.bf16.mxu0 0
        %2093 = vmatpush1.bf16.msra.mxu0 0
        %2094 = vmatprep.subr.bf16.mxu0 0
        %2095 = vmatpush1.bf16.msra.mxu0 0
        %2096 = vmatprep.subr.bf16.mxu0 0
        %2097 = vmatpush1.bf16.msra.mxu0 0
        %2098 = vmatprep.subr.bf16.mxu0 0
        %2099 = vmatpush1.bf16.msra.mxu0 0
        %2100 = vmatprep.subr.bf16.mxu0 0
        %2101 = vmatpush1.bf16.msra.mxu0 0
        %2102 = vmatprep.subr.bf16.mxu0 0
        %2103 = vmatpush1.bf16.msra.mxu0 0
        %2104 = vmatprep.subr.bf16.mxu0 0
        %2105 = vmatpush1.bf16.msra.mxu0 0
        %2106 = vmatprep.subr.bf16.mxu0 0
        %2107 = vmatpush1.bf16.msra.mxu0 %v2090
        %2108 = vmatprep.subr.bf16.mxu0 0
        %2109 = vmatpush2.bf16.msra.mxu0 0
        %2110 = vmatprep.subr.bf16.mxu0 0
        %2111 = vmatpush2.bf16.msra.mxu0 0
        %2112 = vmatprep.subr.bf16.mxu0 0
        %2113 = vmatpush2.bf16.msra.mxu0 0
        %2114 = vmatprep.subr.bf16.mxu0 0
        %2115 = vmatpush2.bf16.msra.mxu0 0
        %2116 = vmatprep.subr.bf16.mxu0 0
        %2117 = vmatpush2.bf16.msra.mxu0 0
        %2118 = vmatprep.subr.bf16.mxu0 0
        %2119 = vmatpush2.bf16.msra.mxu0 0
        %2120 = vmatprep.subr.bf16.mxu0 0
        %2121 = vmatpush2.bf16.msra.mxu0 0
        %2122 = vmatprep.subr.bf16.mxu0 0
        %2123 = vmatpush2.bf16.msra.mxu0 0
        %2124 = vmatprep.mubr.bf16.mxu0 0
        %2125 = vmatmul.mubr.bf16.gmra.mxu0 %v2066
        %v2126 = vpop.f32.mrf.mxu0
        %v2127 = vadd.f32 0.0, %v2126
        %v2128 = vpop.f32.mrf.mxu0
        %v2129 = vpop.f32.mrf.mxu0
        %v2130 = vadd.f32 0.0, %v2129
        %v2131 = vpop.f32.mrf.mxu0
        %2132 = vmatprep.mubr.bf16.mxu0 0
        %2133 = vmatmul.mubr.bf16.gmra.mxu0 %v2069
        %v2134 = vpop.f32.mrf.mxu0
        %v2135 = vadd.f32 0.0, %v2134
        %v2136 = vpop.f32.mrf.mxu0
        %v2137 = vpop.f32.mrf.mxu0
        %v2138 = vadd.f32 0.0, %v2137
        %v2139 = vpop.f32.mrf.mxu0
        %2140 = vmatprep.mubr.bf16.mxu0 0
        %2141 = vmatmul.mubr.bf16.gmra.mxu0 %v2072
        %v2142 = vpop.f32.mrf.mxu0
        %v2143 = vadd.f32 0.0, %v2142
        %v2144 = vpop.f32.mrf.mxu0
        %v2145 = vpop.f32.mrf.mxu0
        %v2146 = vadd.f32 0.0, %v2145
        %v2147 = vpop.f32.mrf.mxu0
        %2148 = vmatprep.mubr.bf16.mxu0 0
        %2149 = vmatmul.mubr.bf16.gmra.mxu0 %v2075
        %v2150 = vpop.f32.mrf.mxu0
        %v2151 = vadd.f32 0.0, %v2150
        %v2152 = vpop.f32.mrf.mxu0
        %v2153 = vpop.f32.mrf.mxu0
        %v2154 = vadd.f32 0.0, %v2153
        %v2155 = vpop.f32.mrf.mxu0
        %2156 = vmatprep.mubr.bf16.mxu0 0
        %2157 = vmatmul.mubr.bf16.gmra.mxu0 %v2078
        %v2158 = vpop.f32.mrf.mxu0
        %v2159 = vadd.f32 0.0, %v2158
        %v2160 = vpop.f32.mrf.mxu0
        %v2161 = vpop.f32.mrf.mxu0
        %v2162 = vadd.f32 0.0, %v2161
        %v2163 = vpop.f32.mrf.mxu0
        %2164 = vmatprep.mubr.bf16.mxu0 0
        %2165 = vmatmul.mubr.bf16.gmra.mxu0 %v2081
        %v2166 = vpop.f32.mrf.mxu0
        %v2167 = vadd.f32 0.0, %v2166
        %v2168 = vpop.f32.mrf.mxu0
        %v2169 = vpop.f32.mrf.mxu0
        %v2170 = vadd.f32 0.0, %v2169
        %v2171 = vpop.f32.mrf.mxu0
        %2172 = vmatprep.mubr.bf16.mxu0 0
        %2173 = vmatmul.mubr.bf16.gmra.mxu0 %v2084
        %v2174 = vpop.f32.mrf.mxu0
        %v2175 = vadd.f32 0.0, %v2174
        %v2176 = vpop.f32.mrf.mxu0
        %v2177 = vpop.f32.mrf.mxu0
        %v2178 = vadd.f32 0.0, %v2177
        %v2179 = vpop.f32.mrf.mxu0
        %2180 = vmatprep.mubr.bf16.mxu0 0
        %2181 = vmatmul.mubr.bf16.gmra.mxu0 %v2087
        %v2182 = vpop.f32.mrf.mxu0
        %v2183 = vadd.f32 0.0, %v2182
        %v2184 = vpop.f32.mrf.mxu0
        %v2185 = vpop.f32.mrf.mxu0
        %v2186 = vadd.f32 0.0, %v2185
        %v2187 = vpop.f32.mrf.mxu0
        %2188 = vdwg.mxu0
        %v2189 = vadd.f32 %v2023, %v2127
        %v2190 = vadd.f32 %v2024, %v2130
        %v2191 = vadd.f32 %v2025, %v2135
        %v2192 = vadd.f32 %v2026, %v2138
        %v2193 = vadd.f32 %v2027, %v2143
        %v2194 = vadd.f32 %v2028, %v2146
        %v2195 = vadd.f32 %v2029, %v2151
        %v2196 = vadd.f32 %v2030, %v2154
        %v2197 = vadd.f32 %v2031, %v2159
        %v2198 = vadd.f32 %v2032, %v2162
        %v2199 = vadd.f32 %v2033, %v2167
        %v2200 = vadd.f32 %v2034, %v2170
        %v2201 = vadd.f32 %v2035, %v2175
        %v2202 = vadd.f32 %v2036, %v2178
        %v2203 = vadd.f32 %v2037, %v2183
        %v2204 = vadd.f32 %v2038, %v2186
        %v2229 = vrot.slane %v1983, 1
        %v2230 = vrot.slane %v1984, 1
        %v2231 = vsel %vm636, %v2229, %v2230
        %v2232 = vrot.slane %v1985, 1
        %v2233 = vsel %vm636, %v2230, %v2232
        %v2234 = vrot.slane %v1986, 1
        %v2235 = vrot.slane %v1987, 1
        %v2236 = vsel %vm636, %v2234, %v2235
        %v2237 = vrot.slane %v1988, 1
        %v2238 = vsel %vm636, %v2235, %v2237
        %v2239 = vrot.slane %v1989, 1
        %v2240 = vrot.slane %v1990, 1
        %v2241 = vsel %vm636, %v2239, %v2240
        %v2242 = vrot.slane %v1991, 1
        %v2243 = vsel %vm636, %v2240, %v2242
        %v2244 = vrot.slane %v1992, 1
        %v2245 = vrot.slane %v1993, 1
        %v2246 = vsel %vm636, %v2244, %v2245
        %v2247 = vrot.slane %v1994, 1
        %v2248 = vsel %vm636, %v2245, %v2247
        %v2249 = vrot.slane %v1995, 1
        %v2250 = vrot.slane %v1996, 1
        %v2251 = vsel %vm636, %v2249, %v2250
        %v2252 = vrot.slane %v1997, 1
        %v2253 = vsel %vm636, %v2250, %v2252
        %v2254 = vrot.slane %v1998, 1
        %v2255 = vrot.slane %v1999, 1
        %v2256 = vsel %vm636, %v2254, %v2255
        %v2257 = vrot.slane %v2000, 1
        %v2258 = vsel %vm636, %v2255, %v2257
        %v2259 = vrot.slane %v2001, 1
        %v2260 = vrot.slane %v2002, 1
        %v2261 = vsel %vm636, %v2259, %v2260
        %v2262 = vrot.slane %v2003, 1
        %v2263 = vsel %vm636, %v2260, %v2262
        %v2264 = vrot.slane %v2004, 1
        %v2265 = vrot.slane %v2005, 1
        %v2266 = vsel %vm636, %v2264, %v2265
        %v2267 = vrot.slane %v2006, 1
        %v2268 = vsel %vm636, %v2265, %v2267
        %v2285 = vmul.f32 %v2231, %v336
        %v2286 = vmul.f32 %v2233, %v341
        %v2287 = vmul.f32 %v2236, %v346
        %v2288 = vmul.f32 %v2238, %v351
        %v2289 = vmul.f32 %v2241, %v356
        %v2290 = vmul.f32 %v2243, %v361
        %v2291 = vmul.f32 %v2246, %v366
        %v2292 = vmul.f32 %v2248, %v371
        %v2293 = vmul.f32 %v2251, %v376
        %v2294 = vmul.f32 %v2253, %v381
        %v2295 = vmul.f32 %v2256, %v386
        %v2296 = vmul.f32 %v2258, %v391
        %v2297 = vmul.f32 %v2261, %v396
        %v2298 = vmul.f32 %v2263, %v401
        %v2299 = vmul.f32 %v2266, %v406
        %v2300 = vmul.f32 %v2268, %v411
        %v2301 = vadd.f32 %v2189, %v2285
        %v2302 = vadd.f32 %v2190, %v2286
        %v2303 = vadd.f32 %v2191, %v2287
        %v2304 = vadd.f32 %v2192, %v2288
        %v2305 = vadd.f32 %v2193, %v2289
        %v2306 = vadd.f32 %v2194, %v2290
        %v2307 = vadd.f32 %v2195, %v2291
        %v2308 = vadd.f32 %v2196, %v2292
        %v2309 = vadd.f32 %v2197, %v2293
        %v2310 = vadd.f32 %v2198, %v2294
        %v2311 = vadd.f32 %v2199, %v2295
        %v2312 = vadd.f32 %v2200, %v2296
        %v2313 = vadd.f32 %v2201, %v2297
        %v2314 = vadd.f32 %v2202, %v2298
        %v2315 = vadd.f32 %v2203, %v2299
        %v2316 = vadd.f32 %v2204, %v2300
        %v2317 = vmax.f32 %v2231, 0.0
        %v2318 = vmax.f32 %v2233, 0.0
        %v2319 = vmax.f32 %v2236, 0.0
        %v2320 = vmax.f32 %v2238, 0.0
        %v2321 = vmax.f32 %v2241, 0.0
        %v2322 = vmax.f32 %v2243, 0.0
        %v2323 = vmax.f32 %v2246, 0.0
        %v2324 = vmax.f32 %v2248, 0.0
        %v2325 = vmax.f32 %v2251, 0.0
        %v2326 = vmax.f32 %v2253, 0.0
        %v2327 = vmax.f32 %v2256, 0.0
        %v2328 = vmax.f32 %v2258, 0.0
        %v2329 = vmax.f32 %v2261, 0.0
        %v2330 = vmax.f32 %v2263, 0.0
        %v2331 = vmax.f32 %v2266, 0.0
        %v2332 = vmax.f32 %v2268, 0.0
        %v2333 = vpack.c.bf16 %v2318, %v2317
        %v2334 = vpack.c.bf16 %v2320, %v2319
        %v2335 = vpack.c.bf16 %v2322, %v2321
        %v2336 = vpack.c.bf16 %v2324, %v2323
        %v2337 = vpack.c.bf16 %v2326, %v2325
        %v2338 = vpack.c.bf16 %v2328, %v2327
        %v2339 = vpack.c.bf16 %v2330, %v2329
        %v2340 = vpack.c.bf16 %v2332, %v2331
        %s2341 = scalar_lea.vmem %s2, 14
        %v2342 = vld [vmem:[%s2341] sm:$0x3]
        %v2344 = vsel %vm470, %v2333, 0
        %v2347 = vsel %vm470, %v2334, 0
        %v2350 = vsel %vm470, %v2335, 0
        %v2353 = vsel %vm470, %v2336, 0
        %v2356 = vsel %vm470, %v2337, 0
        %v2359 = vsel %vm470, %v2338, 0
        %v2362 = vsel %vm470, %v2339, 0
        %v2365 = vsel %vm470, %v2340, 0
        %v2368 = vsel %vm495, %v2342, 0
        %2370 = vmatprep.subr.bf16.mxu0 0
        %2371 = vmatpush1.bf16.msra.mxu0 0
        %2372 = vmatprep.subr.bf16.mxu0 0
        %2373 = vmatpush1.bf16.msra.mxu0 0
        %2374 = vmatprep.subr.bf16.mxu0 0
        %2375 = vmatpush1.bf16.msra.mxu0 0
        %2376 = vmatprep.subr.bf16.mxu0 0
        %2377 = vmatpush1.bf16.msra.mxu0 0
        %2378 = vmatprep.subr.bf16.mxu0 0
        %2379 = vmatpush1.bf16.msra.mxu0 0
        %2380 = vmatprep.subr.bf16.mxu0 0
        %2381 = vmatpush1.bf16.msra.mxu0 0
        %2382 = vmatprep.subr.bf16.mxu0 0
        %2383 = vmatpush1.bf16.msra.mxu0 0
        %2384 = vmatprep.subr.bf16.mxu0 0
        %2385 = vmatpush1.bf16.msra.mxu0 %v2368
        %2386 = vmatprep.subr.bf16.mxu0 0
        %2387 = vmatpush2.bf16.msra.mxu0 0
        %2388 = vmatprep.subr.bf16.mxu0 0
        %2389 = vmatpush2.bf16.msra.mxu0 0
        %2390 = vmatprep.subr.bf16.mxu0 0
        %2391 = vmatpush2.bf16.msra.mxu0 0
        %2392 = vmatprep.subr.bf16.mxu0 0
        %2393 = vmatpush2.bf16.msra.mxu0 0
        %2394 = vmatprep.subr.bf16.mxu0 0
        %2395 = vmatpush2.bf16.msra.mxu0 0
        %2396 = vmatprep.subr.bf16.mxu0 0
        %2397 = vmatpush2.bf16.msra.mxu0 0
        %2398 = vmatprep.subr.bf16.mxu0 0
        %2399 = vmatpush2.bf16.msra.mxu0 0
        %2400 = vmatprep.subr.bf16.mxu0 0
        %2401 = vmatpush2.bf16.msra.mxu0 0
        %2402 = vmatprep.mubr.bf16.mxu0 0
        %2403 = vmatmul.mubr.bf16.gmra.mxu0 %v2344
        %v2404 = vpop.f32.mrf.mxu0
        %v2405 = vadd.f32 0.0, %v2404
        %v2406 = vpop.f32.mrf.mxu0
        %v2407 = vpop.f32.mrf.mxu0
        %v2408 = vadd.f32 0.0, %v2407
        %v2409 = vpop.f32.mrf.mxu0
        %2410 = vmatprep.mubr.bf16.mxu0 0
        %2411 = vmatmul.mubr.bf16.gmra.mxu0 %v2347
        %v2412 = vpop.f32.mrf.mxu0
        %v2413 = vadd.f32 0.0, %v2412
        %v2414 = vpop.f32.mrf.mxu0
        %v2415 = vpop.f32.mrf.mxu0
        %v2416 = vadd.f32 0.0, %v2415
        %v2417 = vpop.f32.mrf.mxu0
        %2418 = vmatprep.mubr.bf16.mxu0 0
        %2419 = vmatmul.mubr.bf16.gmra.mxu0 %v2350
        %v2420 = vpop.f32.mrf.mxu0
        %v2421 = vadd.f32 0.0, %v2420
        %v2422 = vpop.f32.mrf.mxu0
        %v2423 = vpop.f32.mrf.mxu0
        %v2424 = vadd.f32 0.0, %v2423
        %v2425 = vpop.f32.mrf.mxu0
        %2426 = vmatprep.mubr.bf16.mxu0 0
        %2427 = vmatmul.mubr.bf16.gmra.mxu0 %v2353
        %v2428 = vpop.f32.mrf.mxu0
        %v2429 = vadd.f32 0.0, %v2428
        %v2430 = vpop.f32.mrf.mxu0
        %v2431 = vpop.f32.mrf.mxu0
        %v2432 = vadd.f32 0.0, %v2431
        %v2433 = vpop.f32.mrf.mxu0
        %2434 = vmatprep.mubr.bf16.mxu0 0
        %2435 = vmatmul.mubr.bf16.gmra.mxu0 %v2356
        %v2436 = vpop.f32.mrf.mxu0
        %v2437 = vadd.f32 0.0, %v2436
        %v2438 = vpop.f32.mrf.mxu0
        %v2439 = vpop.f32.mrf.mxu0
        %v2440 = vadd.f32 0.0, %v2439
        %v2441 = vpop.f32.mrf.mxu0
        %2442 = vmatprep.mubr.bf16.mxu0 0
        %2443 = vmatmul.mubr.bf16.gmra.mxu0 %v2359
        %v2444 = vpop.f32.mrf.mxu0
        %v2445 = vadd.f32 0.0, %v2444
        %v2446 = vpop.f32.mrf.mxu0
        %v2447 = vpop.f32.mrf.mxu0
        %v2448 = vadd.f32 0.0, %v2447
        %v2449 = vpop.f32.mrf.mxu0
        %2450 = vmatprep.mubr.bf16.mxu0 0
        %2451 = vmatmul.mubr.bf16.gmra.mxu0 %v2362
        %v2452 = vpop.f32.mrf.mxu0
        %v2453 = vadd.f32 0.0, %v2452
        %v2454 = vpop.f32.mrf.mxu0
        %v2455 = vpop.f32.mrf.mxu0
        %v2456 = vadd.f32 0.0, %v2455
        %v2457 = vpop.f32.mrf.mxu0
        %2458 = vmatprep.mubr.bf16.mxu0 0
        %2459 = vmatmul.mubr.bf16.gmra.mxu0 %v2365
        %v2460 = vpop.f32.mrf.mxu0
        %v2461 = vadd.f32 0.0, %v2460
        %v2462 = vpop.f32.mrf.mxu0
        %v2463 = vpop.f32.mrf.mxu0
        %v2464 = vadd.f32 0.0, %v2463
        %v2465 = vpop.f32.mrf.mxu0
        %2466 = vdwg.mxu0
        %v2467 = vadd.f32 %v2301, %v2405
        %v2468 = vadd.f32 %v2302, %v2408
        %v2469 = vadd.f32 %v2303, %v2413
        %v2470 = vadd.f32 %v2304, %v2416
        %v2471 = vadd.f32 %v2305, %v2421
        %v2472 = vadd.f32 %v2306, %v2424
        %v2473 = vadd.f32 %v2307, %v2429
        %v2474 = vadd.f32 %v2308, %v2432
        %v2475 = vadd.f32 %v2309, %v2437
        %v2476 = vadd.f32 %v2310, %v2440
        %v2477 = vadd.f32 %v2311, %v2445
        %v2478 = vadd.f32 %v2312, %v2448
        %v2479 = vadd.f32 %v2313, %v2453
        %v2480 = vadd.f32 %v2314, %v2456
        %v2481 = vadd.f32 %v2315, %v2461
        %v2482 = vadd.f32 %v2316, %v2464
        %v2483 = vrot.slane %v1983, 2
        %v2484 = vrot.slane %v1984, 2
        %v2485 = vsel %vm891, %v2483, %v2484
        %v2486 = vrot.slane %v1985, 2
        %v2487 = vsel %vm891, %v2484, %v2486
        %v2488 = vrot.slane %v1986, 2
        %v2489 = vrot.slane %v1987, 2
        %v2490 = vsel %vm891, %v2488, %v2489
        %v2491 = vrot.slane %v1988, 2
        %v2492 = vsel %vm891, %v2489, %v2491
        %v2493 = vrot.slane %v1989, 2
        %v2494 = vrot.slane %v1990, 2
        %v2495 = vsel %vm891, %v2493, %v2494
        %v2496 = vrot.slane %v1991, 2
        %v2497 = vsel %vm891, %v2494, %v2496
        %v2498 = vrot.slane %v1992, 2
        %v2499 = vrot.slane %v1993, 2
        %v2500 = vsel %vm891, %v2498, %v2499
        %v2501 = vrot.slane %v1994, 2
        %v2502 = vsel %vm891, %v2499, %v2501
        %v2503 = vrot.slane %v1995, 2
        %v2504 = vrot.slane %v1996, 2
        %v2505 = vsel %vm891, %v2503, %v2504
        %v2506 = vrot.slane %v1997, 2
        %v2507 = vsel %vm891, %v2504, %v2506
        %v2508 = vrot.slane %v1998, 2
        %v2509 = vrot.slane %v1999, 2
        %v2510 = vsel %vm891, %v2508, %v2509
        %v2511 = vrot.slane %v2000, 2
        %v2512 = vsel %vm891, %v2509, %v2511
        %v2513 = vrot.slane %v2001, 2
        %v2514 = vrot.slane %v2002, 2
        %v2515 = vsel %vm891, %v2513, %v2514
        %v2516 = vrot.slane %v2003, 2
        %v2517 = vsel %vm891, %v2514, %v2516
        %v2518 = vrot.slane %v2004, 2
        %v2519 = vrot.slane %v2005, 2
        %v2520 = vsel %vm891, %v2518, %v2519
        %v2521 = vrot.slane %v2006, 2
        %v2522 = vsel %vm891, %v2519, %v2521
        %v2539 = vmul.f32 %v2485, %v336
        %v2540 = vmul.f32 %v2487, %v341
        %v2541 = vmul.f32 %v2490, %v346
        %v2542 = vmul.f32 %v2492, %v351
        %v2543 = vmul.f32 %v2495, %v356
        %v2544 = vmul.f32 %v2497, %v361
        %v2545 = vmul.f32 %v2500, %v366
        %v2546 = vmul.f32 %v2502, %v371
        %v2547 = vmul.f32 %v2505, %v376
        %v2548 = vmul.f32 %v2507, %v381
        %v2549 = vmul.f32 %v2510, %v386
        %v2550 = vmul.f32 %v2512, %v391
        %v2551 = vmul.f32 %v2515, %v396
        %v2552 = vmul.f32 %v2517, %v401
        %v2553 = vmul.f32 %v2520, %v406
        %v2554 = vmul.f32 %v2522, %v411
        %v2555 = vadd.f32 %v2467, %v2539
        %v2556 = vadd.f32 %v2468, %v2540
        %v2557 = vadd.f32 %v2469, %v2541
        %v2558 = vadd.f32 %v2470, %v2542
        %v2559 = vadd.f32 %v2471, %v2543
        %v2560 = vadd.f32 %v2472, %v2544
        %v2561 = vadd.f32 %v2473, %v2545
        %v2562 = vadd.f32 %v2474, %v2546
        %v2563 = vadd.f32 %v2475, %v2547
        %v2564 = vadd.f32 %v2476, %v2548
        %v2565 = vadd.f32 %v2477, %v2549
        %v2566 = vadd.f32 %v2478, %v2550
        %v2567 = vadd.f32 %v2479, %v2551
        %v2568 = vadd.f32 %v2480, %v2552
        %v2569 = vadd.f32 %v2481, %v2553
        %v2570 = vadd.f32 %v2482, %v2554
        %v2571 = vmax.f32 %v2485, 0.0
        %v2572 = vmax.f32 %v2487, 0.0
        %v2573 = vmax.f32 %v2490, 0.0
        %v2574 = vmax.f32 %v2492, 0.0
        %v2575 = vmax.f32 %v2495, 0.0
        %v2576 = vmax.f32 %v2497, 0.0
        %v2577 = vmax.f32 %v2500, 0.0
        %v2578 = vmax.f32 %v2502, 0.0
        %v2579 = vmax.f32 %v2505, 0.0
        %v2580 = vmax.f32 %v2507, 0.0
        %v2581 = vmax.f32 %v2510, 0.0
        %v2582 = vmax.f32 %v2512, 0.0
        %v2583 = vmax.f32 %v2515, 0.0
        %v2584 = vmax.f32 %v2517, 0.0
        %v2585 = vmax.f32 %v2520, 0.0
        %v2586 = vmax.f32 %v2522, 0.0
        %v2587 = vpack.c.bf16 %v2572, %v2571
        %v2588 = vpack.c.bf16 %v2574, %v2573
        %v2589 = vpack.c.bf16 %v2576, %v2575
        %v2590 = vpack.c.bf16 %v2578, %v2577
        %v2591 = vpack.c.bf16 %v2580, %v2579
        %v2592 = vpack.c.bf16 %v2582, %v2581
        %v2593 = vpack.c.bf16 %v2584, %v2583
        %v2594 = vpack.c.bf16 %v2586, %v2585
        %s2595 = scalar_lea.vmem %s2, 16
        %v2596 = vld [vmem:[%s2595] sm:$0x3]
        %v2598 = vsel %vm470, %v2587, 0
        %v2601 = vsel %vm470, %v2588, 0
        %v2604 = vsel %vm470, %v2589, 0
        %v2607 = vsel %vm470, %v2590, 0
        %v2610 = vsel %vm470, %v2591, 0
        %v2613 = vsel %vm470, %v2592, 0
        %v2616 = vsel %vm470, %v2593, 0
        %v2619 = vsel %vm470, %v2594, 0
        %v2622 = vsel %vm495, %v2596, 0
        %2624 = vmatprep.subr.bf16.mxu0 0
        %2625 = vmatpush1.bf16.msra.mxu0 0
        %2626 = vmatprep.subr.bf16.mxu0 0
        %2627 = vmatpush1.bf16.msra.mxu0 0
        %2628 = vmatprep.subr.bf16.mxu0 0
        %2629 = vmatpush1.bf16.msra.mxu0 0
        %2630 = vmatprep.subr.bf16.mxu0 0
        %2631 = vmatpush1.bf16.msra.mxu0 0
        %2632 = vmatprep.subr.bf16.mxu0 0
        %2633 = vmatpush1.bf16.msra.mxu0 0
        %2634 = vmatprep.subr.bf16.mxu0 0
        %2635 = vmatpush1.bf16.msra.mxu0 0
        %2636 = vmatprep.subr.bf16.mxu0 0
        %2637 = vmatpush1.bf16.msra.mxu0 0
        %2638 = vmatprep.subr.bf16.mxu0 0
        %2639 = vmatpush1.bf16.msra.mxu0 %v2622
        %2640 = vmatprep.subr.bf16.mxu0 0
        %2641 = vmatpush2.bf16.msra.mxu0 0
        %2642 = vmatprep.subr.bf16.mxu0 0
        %2643 = vmatpush2.bf16.msra.mxu0 0
        %2644 = vmatprep.subr.bf16.mxu0 0
        %2645 = vmatpush2.bf16.msra.mxu0 0
        %2646 = vmatprep.subr.bf16.mxu0 0
        %2647 = vmatpush2.bf16.msra.mxu0 0
        %2648 = vmatprep.subr.bf16.mxu0 0
        %2649 = vmatpush2.bf16.msra.mxu0 0
        %2650 = vmatprep.subr.bf16.mxu0 0
        %2651 = vmatpush2.bf16.msra.mxu0 0
        %2652 = vmatprep.subr.bf16.mxu0 0
        %2653 = vmatpush2.bf16.msra.mxu0 0
        %2654 = vmatprep.subr.bf16.mxu0 0
        %2655 = vmatpush2.bf16.msra.mxu0 0
        %2656 = vmatprep.mubr.bf16.mxu0 0
        %2657 = vmatmul.mubr.bf16.gmra.mxu0 %v2598
        %v2658 = vpop.f32.mrf.mxu0
        %v2659 = vadd.f32 0.0, %v2658
        %v2660 = vpop.f32.mrf.mxu0
        %v2661 = vpop.f32.mrf.mxu0
        %v2662 = vadd.f32 0.0, %v2661
        %v2663 = vpop.f32.mrf.mxu0
        %2664 = vmatprep.mubr.bf16.mxu0 0
        %2665 = vmatmul.mubr.bf16.gmra.mxu0 %v2601
        %v2666 = vpop.f32.mrf.mxu0
        %v2667 = vadd.f32 0.0, %v2666
        %v2668 = vpop.f32.mrf.mxu0
        %v2669 = vpop.f32.mrf.mxu0
        %v2670 = vadd.f32 0.0, %v2669
        %v2671 = vpop.f32.mrf.mxu0
        %2672 = vmatprep.mubr.bf16.mxu0 0
        %2673 = vmatmul.mubr.bf16.gmra.mxu0 %v2604
        %v2674 = vpop.f32.mrf.mxu0
        %v2675 = vadd.f32 0.0, %v2674
        %v2676 = vpop.f32.mrf.mxu0
        %v2677 = vpop.f32.mrf.mxu0
        %v2678 = vadd.f32 0.0, %v2677
        %v2679 = vpop.f32.mrf.mxu0
        %2680 = vmatprep.mubr.bf16.mxu0 0
        %2681 = vmatmul.mubr.bf16.gmra.mxu0 %v2607
        %v2682 = vpop.f32.mrf.mxu0
        %v2683 = vadd.f32 0.0, %v2682
        %v2684 = vpop.f32.mrf.mxu0
        %v2685 = vpop.f32.mrf.mxu0
        %v2686 = vadd.f32 0.0, %v2685
        %v2687 = vpop.f32.mrf.mxu0
        %2688 = vmatprep.mubr.bf16.mxu0 0
        %2689 = vmatmul.mubr.bf16.gmra.mxu0 %v2610
        %v2690 = vpop.f32.mrf.mxu0
        %v2691 = vadd.f32 0.0, %v2690
        %v2692 = vpop.f32.mrf.mxu0
        %v2693 = vpop.f32.mrf.mxu0
        %v2694 = vadd.f32 0.0, %v2693
        %v2695 = vpop.f32.mrf.mxu0
        %2696 = vmatprep.mubr.bf16.mxu0 0
        %2697 = vmatmul.mubr.bf16.gmra.mxu0 %v2613
        %v2698 = vpop.f32.mrf.mxu0
        %v2699 = vadd.f32 0.0, %v2698
        %v2700 = vpop.f32.mrf.mxu0
        %v2701 = vpop.f32.mrf.mxu0
        %v2702 = vadd.f32 0.0, %v2701
        %v2703 = vpop.f32.mrf.mxu0
        %2704 = vmatprep.mubr.bf16.mxu0 0
        %2705 = vmatmul.mubr.bf16.gmra.mxu0 %v2616
        %v2706 = vpop.f32.mrf.mxu0
        %v2707 = vadd.f32 0.0, %v2706
        %v2708 = vpop.f32.mrf.mxu0
        %v2709 = vpop.f32.mrf.mxu0
        %v2710 = vadd.f32 0.0, %v2709
        %v2711 = vpop.f32.mrf.mxu0
        %2712 = vmatprep.mubr.bf16.mxu0 0
        %2713 = vmatmul.mubr.bf16.gmra.mxu0 %v2619
        %v2714 = vpop.f32.mrf.mxu0
        %v2715 = vadd.f32 0.0, %v2714
        %v2716 = vpop.f32.mrf.mxu0
        %v2717 = vpop.f32.mrf.mxu0
        %v2718 = vadd.f32 0.0, %v2717
        %v2719 = vpop.f32.mrf.mxu0
        %2720 = vdwg.mxu0
        %v2721 = vadd.f32 %v2555, %v2659
        %v2722 = vadd.f32 %v2556, %v2662
        %v2723 = vadd.f32 %v2557, %v2667
        %v2724 = vadd.f32 %v2558, %v2670
        %v2725 = vadd.f32 %v2559, %v2675
        %v2726 = vadd.f32 %v2560, %v2678
        %v2727 = vadd.f32 %v2561, %v2683
        %v2728 = vadd.f32 %v2562, %v2686
        %v2729 = vadd.f32 %v2563, %v2691
        %v2730 = vadd.f32 %v2564, %v2694
        %v2731 = vadd.f32 %v2565, %v2699
        %v2732 = vadd.f32 %v2566, %v2702
        %v2733 = vadd.f32 %v2567, %v2707
        %v2734 = vadd.f32 %v2568, %v2710
        %v2735 = vadd.f32 %v2569, %v2715
        %v2736 = vadd.f32 %v2570, %v2718
        %2737 = vst.msk [vmem:[%s258] sm:$0xff] %vm470, %v2721
        %2738 = vst.msk [vmem:[%s258 + $0x8] sm:$0xff] %vm470, %v2722
        %2739 = vst.msk [vmem:[%s258 + $0x10] sm:$0xff] %vm470, %v2723
        %2740 = vst.msk [vmem:[%s258 + $0x18] sm:$0xff] %vm470, %v2724
        %2741 = vst.msk [vmem:[%s258 + $0x20] sm:$0xff] %vm470, %v2725
        %2742 = vst.msk [vmem:[%s258 + $0x28] sm:$0xff] %vm470, %v2726
        %2743 = vst.msk [vmem:[%s258 + $0x30] sm:$0xff] %vm470, %v2727
        %2744 = vst.msk [vmem:[%s258 + $0x38] sm:$0xff] %vm470, %v2728
        %2745 = vst.msk [vmem:[%s258 + $0x40] sm:$0xff] %vm470, %v2729
        %2746 = vst.msk [vmem:[%s258 + $0x48] sm:$0xff] %vm470, %v2730
        %2747 = vst.msk [vmem:[%s258 + $0x50] sm:$0xff] %vm470, %v2731
        %2748 = vst.msk [vmem:[%s258 + $0x58] sm:$0xff] %vm470, %v2732
        %2749 = vst.msk [vmem:[%s258 + $0x60] sm:$0xff] %vm470, %v2733
        %2750 = vst.msk [vmem:[%s258 + $0x68] sm:$0xff] %vm470, %v2734
        %2751 = vst.msk [vmem:[%s258 + $0x70] sm:$0xff] %vm470, %v2735
        %2752 = vst.msk [vmem:[%s258 + $0x78] sm:$0xff] %vm470, %v2736
        %p2753 = scmp.lt.s32.totalorder %s17, 3
        %s2754 = scalar_select %p2753, %s17, 3
        %s2755 = smul.addr %s2754, 16
        %s2756 = smul.addr %s2755, 8
        %s2757 = scalar_lea.vmem %s5, %s2756
        // Predicated region
        $region45: #{mixed_op.1} parent=39 // pred_check
          %p2758 = pneg %p150
        $region46: #{mixed_op.1} parent=39 // pred_check_branch
          %2760 = sbr.rel (%p2758) target = $region48
        $region47: #{mixed_op.1} parent=39 // pred_region
          _
        $region48: #{mixed_op.1} parent=39 // pred_fallthru
          _
      $region40: #{mixed_op.1} parent=5 // pred_fallthru
        _
      %p2761 = scmp.le.s32.totalorder 2, %s12
      // Predicated region
      $region49: #{mixed_op.1} parent=5 // pred_check
        %p2762 = pneg %p2761
      $region50: #{mixed_op.1} parent=5 // pred_check_branch
        %2764 = sbr.rel (%p2762) target = $region52
      $region51: #{mixed_op.1} parent=5 // pred_region
        %s2765 = ssub.s32 %s12, 2
        // Predicated region
        $region53: #{mixed_op.1} parent=51 // pred_check
          %p2766 = pneg %p156
        $region54: #{mixed_op.1} parent=51 // pred_check_branch
          %2768 = sbr.rel (%p2766) target = $region56
        $region55: #{mixed_op.1} parent=51 // pred_region
          %p2769 = scmp.lt.s32.totalorder %s18, 3
          %s2770 = scalar_select %p2769, %s18, 3
          %s2771 = smul.addr %s2770, 16
          %s2772 = smul.addr %s2771, 8
          %s2773 = scalar_lea.vmem %s5, %s2772
        $region56: #{mixed_op.1} parent=51 // pred_fallthru
          _
      $region52: #{mixed_op.1} parent=5 // pred_fallthru
        _
    $region6: #{mixed_op.1} parent=1 // loop_footer
      %s16 = sadd.s32 1, %s12
    $region7: #{mixed_op.1} parent=1 // loop_footer_branch
      %11 = sbr.rel target = $region3
    $region8: #{mixed_op.1} parent=1 // loop_exit
      _
    %2774 = vsyncpa [#allocation3], 1
    %s2775 = scalar_lea.sflag [#allocation3], 1
    %2776 = vsyncpa %s2775, 1

</llo_original>
